<compile_context>
chip_gen: v7x
topology: tpu7x:2x2x1
jax: 0.10.0
libtpu: 0.0.40
codegen_flags: <defaults>
</compile_context>

<pallas_src>
import functools

import jax
import jax.numpy as jnp
from jax.experimental import pallas as pl
from jax.experimental.pallas import tpu as pltpu


def _self_attention_kernel(x_full_ref, x_q_ref, wq_ref, wk_ref, wv_ref,
                           bq_ref, bk_ref, bv_ref, g_ref,
                           out_ref, *rest, approx_recip, emit_attn):
    if emit_attn:
        attn_ref, k_scr, v_scr = rest
    else:
        attn_ref = None
        k_scr, v_scr = rest

    cdt = k_scr.dtype            # MXU operand dtype (bf16 or f32)
    qi = pl.program_id(1)

    # Once per batch element: project K and V over the full token axis and park
    # them in VMEM scratch; they persist across the q-tile loop (qi axis).
    @pl.when(qi == 0)
    def _():
        xf = x_full_ref[0].astype(cdt)                                    # (C, N)
        k = jnp.dot(wk_ref[...], xf,
                    preferred_element_type=jnp.float32) + bk_ref[...]     # (dq, N) f32
        v = jnp.dot(wv_ref[...], xf,
                    preferred_element_type=jnp.float32) + bv_ref[...]     # (C, N)  f32
        k_scr[...] = k.astype(cdt)
        v_scr[...] = v.astype(cdt)

    # Per query tile: Q projection for this tile of tokens.
    xq_f32 = x_q_ref[0]                                                   # (C, tq) f32
    q = jnp.dot(wq_ref[...], xq_f32.astype(cdt),
                preferred_element_type=jnp.float32) + bq_ref[...]         # (dq, tq) f32

    # energy[i, j] = sum_c q[c, i] * k[c, j]   (== torch.bmm(Q^T, K))
    energy = jax.lax.dot_general(
        q.astype(cdt), k_scr[...],
        dimension_numbers=(((0,), (0,)), ((), ())),
        preferred_element_type=jnp.float32)                               # (tq, N) f32

    # Softmax over j, in f32. Row-max subtracted; EUP reciprocal of the row sum
    # replaces a full-width VPU divide.
    m = jnp.max(energy, axis=-1, keepdims=True)
    p = jnp.exp(energy - m)
    s = jnp.sum(p, axis=-1, keepdims=True)
    attn = p * pl.reciprocal(s, approx=approx_recip)                      # (tq, N) f32

    if emit_attn:
        attn_ref[0] = attn

    # out[c, i] = sum_j v[c, j] * attn[i, j]   (== torch.bmm(V, attention^T))
    o = jax.lax.dot_general(
        v_scr[...], attn.astype(cdt),
        dimension_numbers=(((1,), (1,)), ((), ())),
        preferred_element_type=jnp.float32)                               # (C, tq) f32

    out_ref[0] = g_ref[0, 0] * o + xq_f32


def self_attention_forward(x_nchw, wq, wk, wv, bq, bk, bv, gamma, *,
                           q_tile=128, compute_dtype=jnp.bfloat16,
                           return_attention=True, approx_recip=None):
    """x_nchw: (B, C, W, H) f32. Returns (out_nchw, attention) or out_nchw."""
    B, C, W, H = x_nchw.shape
    N = W * H
    dq = wq.shape[0]
    assert C % 8 == 0 and dq == C // 8

    if approx_recip is None:
        approx_recip = compute_dtype != jnp.float32

    # Query-tile size: a multiple of 128 that divides N, else one full row block.
    tq = q_tile if (q_tile is not None and q_tile % 128 == 0 and N % q_tile == 0) else N
    n_q_tiles = N // tq

    x_bcn = x_nchw.reshape(B, C, N)            # torch .view(B, C, W*H): free
    wq_c = wq.astype(compute_dtype)
    wk_c = wk.astype(compute_dtype)
    wv_c = wv.astype(compute_dtype)
    bq2 = bq.reshape(dq, 1).astype(jnp.float32)
    bk2 = bk.reshape(dq, 1).astype(jnp.float32)
    bv2 = bv.reshape(C, 1).astype(jnp.float32)
    g2 = gamma.reshape(1, 1).astype(jnp.float32)

    kernel = functools.partial(_self_attention_kernel,
                               approx_recip=approx_recip,
                               emit_attn=return_attention)

    out_shape = [jax.ShapeDtypeStruct((B, C, N), jnp.float32)]
    out_specs = [pl.BlockSpec((1, C, tq), lambda b, qi: (b, 0, qi))]
    if return_attention:
        out_shape.append(jax.ShapeDtypeStruct((B, N, N), jnp.float32))
        out_specs.append(pl.BlockSpec((1, tq, N), lambda b, qi: (b, qi, 0)))

    # Explicit scoped-VMEM budget for the chosen tiles (double-buffered I/O +
    # K/V scratch + f32 softmax intermediates), so the default limit never
    # silently spills. Shrink q_tile for v7x (64 MiB VMEM) at large N.
    csz = jnp.dtype(compute_dtype).itemsize
    est = (2 * C * N * 4                      # full-x block (for K/V projection)
           + 4 * C * tq * 4                   # x query tile + out tile
           + (2 * tq * N * 4 if return_attention else 0)
           + max(dq, 8) * N * csz + C * N * csz         # K/V scratch
           + 3 * tq * N * 4                   # energy / p / attn intermediates
           + 4 * (2 * dq * C + C * C) * csz)  # weights
    vmem_limit = int(min(100 * 2 ** 20, max(16 * 2 ** 20, 1.25 * est)))

    results = pl.pallas_call(
        kernel,
        out_shape=tuple(out_shape),
        grid_spec=pltpu.PrefetchScalarGridSpec(
            num_scalar_prefetch=0,
            grid=(B, n_q_tiles),
            in_specs=[
                pl.BlockSpec((1, C, N), lambda b, qi: (b, 0, 0)),    # x, full (K/V)
                pl.BlockSpec((1, C, tq), lambda b, qi: (b, 0, qi)),  # x, query tile
                pl.BlockSpec((dq, C), lambda b, qi: (0, 0)),         # Wq
                pl.BlockSpec((dq, C), lambda b, qi: (0, 0)),         # Wk
                pl.BlockSpec((C, C), lambda b, qi: (0, 0)),          # Wv
                pl.BlockSpec((dq, 1), lambda b, qi: (0, 0)),         # bq
                pl.BlockSpec((dq, 1), lambda b, qi: (0, 0)),         # bk
                pl.BlockSpec((C, 1), lambda b, qi: (0, 0)),          # bv
                pl.BlockSpec((1, 1), lambda b, qi: (0, 0)),          # gamma
            ],
            out_specs=out_specs,
            scratch_shapes=[
                pltpu.VMEM((dq, N), compute_dtype),                  # K  (dq, N)
                pltpu.VMEM((C, N), compute_dtype),                   # V  (C, N)
            ],
        ),
        compiler_params=pltpu.CompilerParams(
            dimension_semantics=("parallel", "arbitrary"),
            vmem_limit_bytes=vmem_limit,
        ),
    )(x_bcn, x_bcn, wq_c, wk_c, wv_c, bq2, bk2, bv2, g2)

    out_nchw = results[0].reshape(B, C, W, H)  # already channel-major: free
    if return_attention:
        return out_nchw, results[1]
    return out_nchw


def reference_forward(x_nchw, wq, wk, wv, bq, bk, bv, gamma):
    """Pure-JAX f32 reference matching the PyTorch forward semantics."""
    B, C, W, H = x_nchw.shape
    N = W * H
    xf = x_nchw.reshape(B, C, N)
    q = jnp.einsum('oc,bcn->bon', wq, xf) + bq[None, :, None]
    k = jnp.einsum('oc,bcn->bon', wk, xf) + bk[None, :, None]
    v = jnp.einsum('oc,bcn->bon', wv, xf) + bv[None, :, None]
    energy = jnp.einsum('bci,bcj->bij', q, k)
    attn = jax.nn.softmax(energy, axis=-1)
    out = jnp.einsum('bcj,bij->bci', v, attn)
    out = gamma[0] * out.reshape(B, C, W, H) + x_nchw
    return out, attn


if __name__ == "__main__":
    B, C, W, H = 2, 16, 16, 16
    dq = C // 8

    key = jax.random.PRNGKey(0)
    kx, k1, k2, k3, k4, k5, k6 = jax.random.split(key, 7)

    x = jax.random.normal(kx, (B, C, W, H), dtype=jnp.float32)
    scale = 1.0 / jnp.sqrt(jnp.float32(C))
    wq = jax.random.normal(k1, (dq, C), dtype=jnp.float32) * scale
    wk = jax.random.normal(k2, (dq, C), dtype=jnp.float32) * scale
    wv = jax.random.normal(k3, (C, C), dtype=jnp.float32) * scale
    bq = jax.random.normal(k4, (dq,), dtype=jnp.float32) * 0.1
    bk = jax.random.normal(k5, (dq,), dtype=jnp.float32) * 0.1
    bv = jax.random.normal(k6, (C,), dtype=jnp.float32) * 0.1
    # torch initializes gamma to 0 (out == x); use a non-zero gamma here so the
    # attention branch of the residual is actually exercised by the checks.
    gamma = jnp.full((1,), 0.5, dtype=jnp.float32)

    out_ref, attn_ref = reference_forward(x, wq, wk, wv, bq, bk, bv, gamma)

    # 1) f32 compute path: tight structural/numerical check.
    out_f32, attn_f32 = self_attention_forward(
        x, wq, wk, wv, bq, bk, bv, gamma,
        q_tile=128, compute_dtype=jnp.float32)
    out_f32 = jax.block_until_ready(out_f32)
    attn_f32 = jax.block_until_ready(attn_f32)
    assert out_f32.shape == (B, C, W, H)
    assert attn_f32.shape == (B, W * H, W * H)
    assert jnp.allclose(out_f32, out_ref, atol=2e-4, rtol=2e-4)
    assert jnp.allclose(attn_f32, attn_ref, atol=2e-4, rtol=2e-4)

    # 2) bf16-operand / f32-accumulate path (the fast MXU configuration).
    out_bf, attn_bf = self_attention_forward(
        x, wq, wk, wv, bq, bk, bv, gamma,
        q_tile=128, compute_dtype=jnp.bfloat16)
    out_bf = jax.block_until_ready(out_bf)
    attn_bf = jax.block_until_ready(attn_bf)
    assert jnp.allclose(out_bf, out_ref, atol=6e-2, rtol=6e-2)
    assert jnp.allclose(attn_bf, attn_ref, atol=3e-3, rtol=2e-1)

    # 3) Variant that skips the (B, N, N) attention-map HBM writeback.
    out_noattn = self_attention_forward(
        x, wq, wk, wv, bq, bk, bv, gamma,
        q_tile=128, compute_dtype=jnp.bfloat16, return_attention=False)
    out_noattn = jax.block_until_ready(out_noattn)
    assert jnp.allclose(out_noattn, out_ref, atol=6e-2, rtol=6e-2)

    print("KERNEL_OK")
</pallas_src>

<mosaic_0001>
module attributes {stable_mosaic.version = 11 : i64} {
  func.func @_self_attention_kernel(%arg0: i32, %arg1: i32, %arg2: memref<1x16x256xf32, #tpu.memory_space<vmem>>, %arg3: memref<1x16x128xf32, #tpu.memory_space<vmem>>, %arg4: memref<2x16xf32, #tpu.memory_space<vmem>>, %arg5: memref<2x16xf32, #tpu.memory_space<vmem>>, %arg6: memref<16x16xf32, #tpu.memory_space<vmem>>, %arg7: memref<2x1xf32, #tpu.memory_space<vmem>>, %arg8: memref<2x1xf32, #tpu.memory_space<vmem>>, %arg9: memref<16x1xf32, #tpu.memory_space<vmem>>, %arg10: memref<1x1xf32, #tpu.memory_space<vmem>>, %arg11: memref<1x16x128xf32, #tpu.memory_space<vmem>>, %arg12: memref<1x128x256xf32, #tpu.memory_space<vmem>>, %arg13: memref<2x256xf32, #tpu.memory_space<vmem>>, %arg14: memref<16x256xf32, #tpu.memory_space<vmem>>) attributes {dimension_semantics = [#tpu.dimension_semantics<parallel>, #tpu.dimension_semantics<arbitrary>], iteration_bounds = array<i64: 2, 2>, scalar_prefetch = 0 : i64, scratch_operands = 2 : i64, tpu.core_type = #tpu.core_type<tc>, window_params = [{transform_indices = @transform_0, window_bounds = array<i64: 1, 16, 256>}, {transform_indices = @transform_1, window_bounds = array<i64: 1, 16, 128>}, {pipeline_mode = #tpu.pipeline_mode<synchronous>, transform_indices = @transform_2, window_bounds = array<i64: 2, 16>}, {pipeline_mode = #tpu.pipeline_mode<synchronous>, transform_indices = @transform_3, window_bounds = array<i64: 2, 16>}, {pipeline_mode = #tpu.pipeline_mode<synchronous>, transform_indices = @transform_4, window_bounds = array<i64: 16, 16>}, {pipeline_mode = #tpu.pipeline_mode<synchronous>, transform_indices = @transform_5, window_bounds = array<i64: 2, 1>}, {pipeline_mode = #tpu.pipeline_mode<synchronous>, transform_indices = @transform_6, window_bounds = array<i64: 2, 1>}, {pipeline_mode = #tpu.pipeline_mode<synchronous>, transform_indices = @transform_7, window_bounds = array<i64: 16, 1>}, {pipeline_mode = #tpu.pipeline_mode<synchronous>, transform_indices = @transform_8, window_bounds = array<i64: 1, 1>}, {transform_indices = @transform_9, window_bounds = array<i64: 1, 16, 128>}, {transform_indices = @transform_10, window_bounds = array<i64: 1, 128, 256>}]} {
    %c0_i32 = arith.constant 0 : i32
    %0 = arith.cmpi eq, %arg1, %c0_i32 : i32
    %1 = arith.extui %0 : i1 to i32
    %c0_i32_0 = arith.constant 0 : i32
    %2 = arith.cmpi ne, %1, %c0_i32_0 : i32
    scf.if %2 {
      %c0_23 = arith.constant 0 : index
      %c0_24 = arith.constant 0 : index
      %c0_25 = arith.constant 0 : index
      %35 = vector.load %arg2[%c0_23, %c0_24, %c0_25] : memref<1x16x256xf32, #tpu.memory_space<vmem>>, vector<1x16x256xf32>
      %36 = vector.shape_cast %35 : vector<1x16x256xf32> to vector<16x256xf32>
      %c0_26 = arith.constant 0 : index
      %c0_27 = arith.constant 0 : index
      %37 = vector.load %arg5[%c0_26, %c0_27] : memref<2x16xf32, #tpu.memory_space<vmem>>, vector<2x16xf32>
      %cst_28 = arith.constant dense<0.000000e+00> : vector<2x256xf32>
      %38 = tpu.matmul %37, %36, %cst_28 {dimension_numbers = #tpu.dot_dimension_numbers<[1], [0], [0], [1], [0, 0, 1, 1], [], []>} : vector<2x16xf32>, vector<16x256xf32>, vector<2x256xf32> -> vector<2x256xf32>
      %c0_29 = arith.constant 0 : index
      %c0_30 = arith.constant 0 : index
      %39 = vector.load %arg8[%c0_29, %c0_30] : memref<2x1xf32, #tpu.memory_space<vmem>>, vector<2x1xf32>
      %40 = vector.broadcast %39 : vector<2x1xf32> to vector<2x256xf32>
      %41 = arith.addf %38, %40 : vector<2x256xf32>
      %c0_31 = arith.constant 0 : index
      %c0_32 = arith.constant 0 : index
      %42 = vector.load %arg6[%c0_31, %c0_32] : memref<16x16xf32, #tpu.memory_space<vmem>>, vector<16x16xf32>
      %cst_33 = arith.constant dense<0.000000e+00> : vector<16x256xf32>
      %43 = tpu.matmul %42, %36, %cst_33 {dimension_numbers = #tpu.dot_dimension_numbers<[1], [0], [0], [1], [0, 0, 1, 1], [], []>} : vector<16x16xf32>, vector<16x256xf32>, vector<16x256xf32> -> vector<16x256xf32>
      %c0_34 = arith.constant 0 : index
      %c0_35 = arith.constant 0 : index
      %44 = vector.load %arg9[%c0_34, %c0_35] : memref<16x1xf32, #tpu.memory_space<vmem>>, vector<16x1xf32>
      %45 = vector.broadcast %44 : vector<16x1xf32> to vector<16x256xf32>
      %46 = arith.addf %43, %45 : vector<16x256xf32>
      %c0_36 = arith.constant 0 : index
      %c0_37 = arith.constant 0 : index
      %47 = vector.load %arg13[%c0_36, %c0_37] : memref<2x256xf32, #tpu.memory_space<vmem>>, vector<2x256xf32>
      tpu.vector_store %arg13[%c0_36, %c0_37], %41 {strides = array<i32>} : memref<2x256xf32, #tpu.memory_space<vmem>>, vector<2x256xf32>,
      %c0_38 = arith.constant 0 : index
      %c0_39 = arith.constant 0 : index
      %48 = vector.load %arg14[%c0_38, %c0_39] : memref<16x256xf32, #tpu.memory_space<vmem>>, vector<16x256xf32>
      tpu.vector_store %arg14[%c0_38, %c0_39], %46 {strides = array<i32>} : memref<16x256xf32, #tpu.memory_space<vmem>>, vector<16x256xf32>,
    } else {
    }
    %c0 = arith.constant 0 : index
    %c0_1 = arith.constant 0 : index
    %c0_2 = arith.constant 0 : index
    %3 = vector.load %arg3[%c0, %c0_1, %c0_2] : memref<1x16x128xf32, #tpu.memory_space<vmem>>, vector<1x16x128xf32>
    %4 = vector.shape_cast %3 : vector<1x16x128xf32> to vector<16x128xf32>
    %c0_3 = arith.constant 0 : index
    %c0_4 = arith.constant 0 : index
    %5 = vector.load %arg4[%c0_3, %c0_4] : memref<2x16xf32, #tpu.memory_space<vmem>>, vector<2x16xf32>
    %cst = arith.constant dense<0.000000e+00> : vector<2x128xf32>
    %6 = tpu.matmul %5, %4, %cst {dimension_numbers = #tpu.dot_dimension_numbers<[1], [0], [0], [1], [0, 0, 1, 1], [], []>} : vector<2x16xf32>, vector<16x128xf32>, vector<2x128xf32> -> vector<2x128xf32>
    %c0_5 = arith.constant 0 : index
    %c0_6 = arith.constant 0 : index
    %7 = vector.load %arg7[%c0_5, %c0_6] : memref<2x1xf32, #tpu.memory_space<vmem>>, vector<2x1xf32>
    %8 = vector.broadcast %7 : vector<2x1xf32> to vector<2x128xf32>
    %9 = arith.addf %6, %8 : vector<2x128xf32>
    %c0_7 = arith.constant 0 : index
    %c0_8 = arith.constant 0 : index
    %10 = vector.load %arg13[%c0_7, %c0_8] : memref<2x256xf32, #tpu.memory_space<vmem>>, vector<2x256xf32>
    %cst_9 = arith.constant dense<0.000000e+00> : vector<128x256xf32>
    %11 = tpu.matmul %9, %10, %cst_9 {dimension_numbers = #tpu.dot_dimension_numbers<[0], [0], [1], [1], [0, 1, 1, 1], [], []>} : vector<2x128xf32>, vector<2x256xf32>, vector<128x256xf32> -> vector<128x256xf32>
    %cst_10 = arith.constant dense<0xFF800000> : vector<128xf32>
    %12 = vector.multi_reduction <maximumf>, %11, %cst_10 [1] : vector<128x256xf32> to vector<128xf32>
    %13 = vector.shape_cast %12 : vector<128xf32> to vector<128x1xf32>
    %14 = vector.broadcast %13 : vector<128x1xf32> to vector<128x256xf32>
    %15 = arith.subf %11, %14 : vector<128x256xf32>
    %16 = math.exp %15 : vector<128x256xf32>
    %cst_11 = arith.constant dense<0.000000e+00> : vector<128xf32>
    %17 = vector.multi_reduction <add>, %16, %cst_11 [1] : vector<128x256xf32> to vector<128xf32>
    %18 = vector.shape_cast %17 : vector<128xf32> to vector<128x1xf32>
    %19 = tpu.reciprocal %18 : vector<128x1xf32> -> vector<128x1xf32>
    %20 = vector.broadcast %19 : vector<128x1xf32> to vector<128x256xf32>
    %21 = arith.mulf %16, %20 : vector<128x256xf32>
    %c0_12 = arith.constant 0 : index
    %c0_13 = arith.constant 0 : index
    %c0_14 = arith.constant 0 : index
    %22 = vector.load %arg12[%c0_12, %c0_13, %c0_14] : memref<1x128x256xf32, #tpu.memory_space<vmem>>, vector<1x128x256xf32>
    %23 = vector.shape_cast %22 : vector<1x128x256xf32> to vector<128x256xf32>
    %24 = vector.shape_cast %21 : vector<128x256xf32> to vector<1x128x256xf32>
    tpu.vector_store %arg12[%c0_12, %c0_13, %c0_14], %24 {strides = array<i32>} : memref<1x128x256xf32, #tpu.memory_space<vmem>>, vector<1x128x256xf32>,
    %c0_15 = arith.constant 0 : index
    %c0_16 = arith.constant 0 : index
    %25 = vector.load %arg14[%c0_15, %c0_16] : memref<16x256xf32, #tpu.memory_space<vmem>>, vector<16x256xf32>
    %cst_17 = arith.constant dense<0.000000e+00> : vector<16x128xf32>
    %26 = tpu.matmul %25, %21, %cst_17 {dimension_numbers = #tpu.dot_dimension_numbers<[1], [1], [0], [0], [0, 0, 1, 0], [], []>} : vector<16x256xf32>, vector<128x256xf32>, vector<16x128xf32> -> vector<16x128xf32>
    %c0_18 = arith.constant 0 : index
    %c0_19 = arith.constant 0 : index
    %27 = vector.load %arg10[%c0_18, %c0_19] : memref<1x1xf32, #tpu.memory_space<vmem>>, vector<1x1xf32>
    %28 = vector.extract %27[0, 0] : f32 from vector<1x1xf32>
    %29 = vector.broadcast %28 : f32 to vector<16x128xf32>
    %30 = arith.mulf %29, %26 : vector<16x128xf32>
    %31 = arith.addf %30, %4 : vector<16x128xf32>
    %c0_20 = arith.constant 0 : index
    %c0_21 = arith.constant 0 : index
    %c0_22 = arith.constant 0 : index
    %32 = vector.load %arg11[%c0_20, %c0_21, %c0_22] : memref<1x16x128xf32, #tpu.memory_space<vmem>>, vector<1x16x128xf32>
    %33 = vector.shape_cast %32 : vector<1x16x128xf32> to vector<16x128xf32>
    %34 = vector.shape_cast %31 : vector<16x128xf32> to vector<1x16x128xf32>
    tpu.vector_store %arg11[%c0_20, %c0_21, %c0_22], %34 {strides = array<i32>} : memref<1x16x128xf32, #tpu.memory_space<vmem>>, vector<1x16x128xf32>,
    return
  }
  func.func @transform_0(%arg0: i32, %arg1: i32) -> (i32, i32, i32) {
    %c0_i32 = arith.constant 0 : i32
    %c0_i32_0 = arith.constant 0 : i32
    %c0_i32_1 = arith.constant 0 : i32
    return %arg0, %c0_i32, %c0_i32_0 : i32, i32, i32
  }
  func.func @transform_1(%arg0: i32, %arg1: i32) -> (i32, i32, i32) {
    %c0_i32 = arith.constant 0 : i32
    %c0_i32_0 = arith.constant 0 : i32
    return %arg0, %c0_i32, %arg1 : i32, i32, i32
  }
  func.func @transform_2(%arg0: i32, %arg1: i32) -> (i32, i32) {
    %c0_i32 = arith.constant 0 : i32
    %c0_i32_0 = arith.constant 0 : i32
    %c0_i32_1 = arith.constant 0 : i32
    return %c0_i32, %c0_i32_0 : i32, i32
  }
  func.func @transform_3(%arg0: i32, %arg1: i32) -> (i32, i32) {
    %c0_i32 = arith.constant 0 : i32
    %c0_i32_0 = arith.constant 0 : i32
    %c0_i32_1 = arith.constant 0 : i32
    return %c0_i32, %c0_i32_0 : i32, i32
  }
  func.func @transform_4(%arg0: i32, %arg1: i32) -> (i32, i32) {
    %c0_i32 = arith.constant 0 : i32
    %c0_i32_0 = arith.constant 0 : i32
    %c0_i32_1 = arith.constant 0 : i32
    return %c0_i32, %c0_i32_0 : i32, i32
  }
  func.func @transform_5(%arg0: i32, %arg1: i32) -> (i32, i32) {
    %c0_i32 = arith.constant 0 : i32
    %c0_i32_0 = arith.constant 0 : i32
    %c0_i32_1 = arith.constant 0 : i32
    return %c0_i32, %c0_i32_0 : i32, i32
  }
  func.func @transform_6(%arg0: i32, %arg1: i32) -> (i32, i32) {
    %c0_i32 = arith.constant 0 : i32
    %c0_i32_0 = arith.constant 0 : i32
    %c0_i32_1 = arith.constant 0 : i32
    return %c0_i32, %c0_i32_0 : i32, i32
  }
  func.func @transform_7(%arg0: i32, %arg1: i32) -> (i32, i32) {
    %c0_i32 = arith.constant 0 : i32
    %c0_i32_0 = arith.constant 0 : i32
    %c0_i32_1 = arith.constant 0 : i32
    return %c0_i32, %c0_i32_0 : i32, i32
  }
  func.func @transform_8(%arg0: i32, %arg1: i32) -> (i32, i32) {
    %c0_i32 = arith.constant 0 : i32
    %c0_i32_0 = arith.constant 0 : i32
    %c0_i32_1 = arith.constant 0 : i32
    return %c0_i32, %c0_i32_0 : i32, i32
  }
  func.func @transform_9(%arg0: i32, %arg1: i32) -> (i32, i32, i32) {
    %c0_i32 = arith.constant 0 : i32
    %c0_i32_0 = arith.constant 0 : i32
    return %arg0, %c0_i32, %arg1 : i32, i32, i32
  }
  func.func @transform_10(%arg0: i32, %arg1: i32) -> (i32, i32, i32) {
    %c0_i32 = arith.constant 0 : i32
    %c0_i32_0 = arith.constant 0 : i32
    return %arg0, %arg1, %c0_i32 : i32, i32, i32
  }
}

</mosaic_0001>

<llo_original>
// kernel: tpu_custom_call.1
$region0: #{tpu_custom_call.1}
  #allocation0 [shape = 'u32[]', space=smem, size = 0x4, offset = 0x4, fixed_abs, tag = 'smem constant byte address 0x4 - core index']
  #allocation1 [shape = 'u32[144,128]{1,0:T(1,128)}', space=vmem, size = 0x12000, scoped, tag = 'internal scratch']
  #allocation2 [shape = 'f32[2,256]{1,0:T(2,128)}', space=vmem, size = 0x800, scoped, tag = 'scratch operand']
  #allocation3 [shape = 'f32[16,256]{1,0:T(8,128)}', space=vmem, size = 0x4000, scoped, tag = 'scratch operand']
  #allocation4 [shape = 'f32[1,1]{1,0:T(1,128)S(1)}', space=vmem, size = 0x200, scoped, tag = 'scoped memory for tpu_custom_call.1']
  %s0 = inlined_call_operand.hbm [shape: f32[2,16,256], index: 0, kind: input, shape index: {}]
  %s1 = inlined_call_operand.hbm [shape: f32[2,16,256], index: 1, kind: input, shape index: {}]
  %s2 = inlined_call_operand.vmem [shape: f32[2,16], index: 2, kind: input, shape index: {}]
  %s3 = inlined_call_operand.vmem [shape: f32[2,16], index: 3, kind: input, shape index: {}]
  %s4 = inlined_call_operand.vmem [shape: f32[16,16], index: 4, kind: input, shape index: {}]
  %s5 = inlined_call_operand.vmem [shape: f32[2,1], index: 5, kind: input, shape index: {}]
  %s6 = inlined_call_operand.vmem [shape: f32[2,1], index: 6, kind: input, shape index: {}]
  %s7 = inlined_call_operand.vmem [shape: f32[16,1], index: 7, kind: input, shape index: {}]
  %s8 = inlined_call_operand.<no memory space> [shape: f32[1,1], index: 8, kind: input, shape index: {}]
  %s9 = inlined_call_operand.hbm [shape: f32[2,16,256], index: 9, kind: output, shape index: {0}]
  %s10 = inlined_call_operand.hbm [shape: f32[2,256,256], index: 10, kind: output, shape index: {1}]
  %11 = xla_tuple %s9, %s10
  %s12 = sld [smem:[#allocation0]]
  $region89: #{tpu_custom_call.1} parent=0
    _
  %s14 = ssub.s32 1, %s12
  %s15 = scalar_select 0, %s14, %s12
  %v16 = vstv %s8
  %17 = vst [vmem:[#allocation4] sm:$0x1] %v16
  $region1: #{tpu_custom_call.1} parent=0
    #allocation5 [shape = 'u8[32768]{0}', space=vmem, size = 0x8000, scoped, tag = 'input window, operand 0']
    #allocation6 [shape = 's32[2]{0}', space=sflag, size = 0x8, scoped, tag = 'scoped memory for tpu_custom_call.1']
    #allocation7 [shape = 's32[2]{0}', space=sflag, size = 0x8, scoped, tag = 'scoped memory for tpu_custom_call.1']
    #allocation8 [shape = 'u8[16384]{0}', space=vmem, size = 0x4000, scoped, tag = 'input window, operand 1']
    #allocation9 [shape = 's32[2]{0}', space=sflag, size = 0x8, scoped, tag = 'scoped memory for tpu_custom_call.1']
    #allocation10 [shape = 'u8[16384]{0}', space=vmem, size = 0x4000, scoped, tag = 'output window, operand 0']
    #allocation11 [shape = 'u8[262144]{0}', space=vmem, size = 0x40000, scoped, tag = 'output window, operand 1']
    #allocation12 [shape = 's32[2]{0}', space=sflag, size = 0x8, scoped, tag = 'scoped memory for tpu_custom_call.1']
    %18 = vsyncpa [#allocation6], 0
    %s19 = scalar_lea.sflag [#allocation6], 1
    %20 = vsyncpa %s19, 0
    %21 = vsyncpa [#allocation9], 0
    %s22 = scalar_lea.sflag [#allocation9], 1
    %23 = vsyncpa %s22, 0
    %24 = vsyncpa [#allocation7], 0
    %s25 = scalar_lea.sflag [#allocation7], 1
    %26 = vsyncpa %s25, 0
    %27 = vsyncpa [#allocation12], 0
    %s28 = scalar_lea.sflag [#allocation12], 1
    %29 = vsyncpa %s28, 0
    loop: start=0, step=1, limit=6
    $region2: #{tpu_custom_call.1} parent=1 // loop_pre_header
      _
    $region3: #{tpu_custom_call.1} parent=1 // loop_header
      %s31 = sphi 0, %s35
      %p32 = scmp.ge.s32.totalorder %s31, 6
      %s38 = sphi 0, %s50
      %s39 = sphi 0, %s46
      %s40 = sphi 0, %s38
      %s41 = sphi 0, %s39
      %s42 = sphi 0, %s40
      %s43 = sphi 0, %s41
      %s53 = sphi 0, %s55
      %s56 = sphi 0, %s53
      %s57 = sphi 0, %s56
      %s73 = sphi 0, %s57
      %s81 = sphi 0, %s83
      %s84 = sphi 0, %s81
      %s85 = sphi 0, %s84
      %s101 = sphi 0, %s85
      %s105 = sphi 0, %s105
      %s107 = sphi 0, %s105
      %s108 = sphi 0, %s107
      %s122 = sphi 0, %s108
      %s126 = sphi 0, %s126
      %s128 = sphi 0, %s126
      %s129 = sphi 0, %s128
      %s143 = sphi 0, %s129
      %s147 = sphi 0, %s147
      %s149 = sphi 0, %s147
      %s150 = sphi 0, %s149
      %s164 = sphi 0, %s150
      %s168 = sphi 0, %s168
      %s170 = sphi 0, %s168
      %s171 = sphi 0, %s170
      %s185 = sphi 0, %s171
      %s189 = sphi 0, %s189
      %s191 = sphi 0, %s189
      %s192 = sphi 0, %s191
      %s206 = sphi 0, %s192
      %s210 = sphi 0, %s210
      %s212 = sphi 0, %s210
      %s213 = sphi 0, %s212
      %s227 = sphi 0, %s213
      %s231 = sphi 0, %s231
      %s233 = sphi 0, %s231
      %s234 = sphi 0, %s233
      %s248 = sphi 0, %s234
      %s256 = sphi 0, %s258
      %s259 = sphi 0, %s256
      %s260 = sphi 0, %s259
      %s276 = sphi 0, %s260
      %s284 = sphi 0, %s286
      %s287 = sphi 0, %s284
      %s288 = sphi 0, %s287
      %s304 = sphi 0, %s288
    $region4: #{tpu_custom_call.1} parent=1 // loop_header_branch
      %34 = sbr.rel (%p32) target = $region8
    $region5: #{tpu_custom_call.1} parent=1 // loop_body
      %s36 = ssub.s32 %s31, 1
      %s37 = ssub.s32 %s31, 2
      %s44 = sadd.s32 1, %s39
      %p45 = scmp.ge.s32.totalorder %s44, 2
      %s46 = scalar_select %p45, 0, %s44
      %s47 = sadd.s32 1, %s38
      %s48 = scalar_select %p45, %s47, %s38
      %p49 = scmp.ge.s32.totalorder %s48, 2
      %s50 = scalar_select %p49, 0, %s48
      %s51 = ssub.s32 %s38, %s50
      %p52 = scmp.eq.s32.totalorder %s51, 0
      %s54 = sadd.s32 %s53, 1
      %s55 = scalar_select %p52, %s53, %s54
      %p58 = pneg %p52
      %p59 = scmp.eq.s32.totalorder %s31, 3
      %p60 = por %p58, %p59
      %p61 = scmp.ne.s32.totalorder %s53, %s56
      %p62 = scmp.eq.s32.totalorder %s31, 0
      %p63 = por %p61, %p62
      %p64 = scmp.ne.s32.totalorder %s53, %s56
      %p65 = scmp.eq.s32.totalorder %s36, 3
      %p66 = por %p64, %p65
      %p67 = scmp.ne.s32.totalorder %s56, %s57
      %p68 = scmp.eq.s32.totalorder %s36, 0
      %p69 = por %p67, %p68
      %p70 = scmp.ne.s32.totalorder %s56, %s57
      %p71 = scmp.eq.s32.totalorder %s37, 3
      %p72 = por %p70, %p71
      %p74 = scmp.ne.s32.totalorder %s57, %s73
      %p75 = scmp.eq.s32.totalorder %s37, 0
      %p76 = por %p74, %p75
      %s77 = ssub.s32 %s38, %s50
      %s78 = ssub.s32 %s39, %s46
      %s79 = sor.u32 %s77, %s78
      %p80 = scmp.eq.s32.totalorder %s79, 0
      %s82 = sadd.s32 %s81, 1
      %s83 = scalar_select %p80, %s81, %s82
      %p86 = pneg %p80
      %p87 = scmp.eq.s32.totalorder %s31, 3
      %p88 = por %p86, %p87
      %p89 = scmp.ne.s32.totalorder %s81, %s84
      %p90 = scmp.eq.s32.totalorder %s31, 0
      %p91 = por %p89, %p90
      %p92 = scmp.ne.s32.totalorder %s81, %s84
      %p93 = scmp.eq.s32.totalorder %s36, 3
      %p94 = por %p92, %p93
      %p95 = scmp.ne.s32.totalorder %s84, %s85
      %p96 = scmp.eq.s32.totalorder %s36, 0
      %p97 = por %p95, %p96
      %p98 = scmp.ne.s32.totalorder %s84, %s85
      %p99 = scmp.eq.s32.totalorder %s37, 3
      %p100 = por %p98, %p99
      %p102 = scmp.ne.s32.totalorder %s85, %s101
      %p103 = scmp.eq.s32.totalorder %s37, 0
      %p104 = por %p102, %p103
      %s106 = sadd.s32 %s105, 1
      %p109 = scmp.eq.s32.totalorder %s31, 3
      %p110 = scmp.ne.s32.totalorder %s105, %s107
      %p111 = scmp.eq.s32.totalorder %s31, 0
      %p112 = por %p110, %p111
      %p113 = scmp.ne.s32.totalorder %s105, %s107
      %p114 = scmp.eq.s32.totalorder %s36, 3
      %p115 = por %p113, %p114
      %p116 = scmp.ne.s32.totalorder %s107, %s108
      %p117 = scmp.eq.s32.totalorder %s36, 0
      %p118 = por %p116, %p117
      %p119 = scmp.ne.s32.totalorder %s107, %s108
      %p120 = scmp.eq.s32.totalorder %s37, 3
      %p121 = por %p119, %p120
      %p123 = scmp.ne.s32.totalorder %s108, %s122
      %p124 = scmp.eq.s32.totalorder %s37, 0
      %p125 = por %p123, %p124
      %s127 = sadd.s32 %s126, 1
      %p130 = scmp.eq.s32.totalorder %s31, 3
      %p131 = scmp.ne.s32.totalorder %s126, %s128
      %p132 = scmp.eq.s32.totalorder %s31, 0
      %p133 = por %p131, %p132
      %p134 = scmp.ne.s32.totalorder %s126, %s128
      %p135 = scmp.eq.s32.totalorder %s36, 3
      %p136 = por %p134, %p135
      %p137 = scmp.ne.s32.totalorder %s128, %s129
      %p138 = scmp.eq.s32.totalorder %s36, 0
      %p139 = por %p137, %p138
      %p140 = scmp.ne.s32.totalorder %s128, %s129
      %p141 = scmp.eq.s32.totalorder %s37, 3
      %p142 = por %p140, %p141
      %p144 = scmp.ne.s32.totalorder %s129, %s143
      %p145 = scmp.eq.s32.totalorder %s37, 0
      %p146 = por %p144, %p145
      %s148 = sadd.s32 %s147, 1
      %p151 = scmp.eq.s32.totalorder %s31, 3
      %p152 = scmp.ne.s32.totalorder %s147, %s149
      %p153 = scmp.eq.s32.totalorder %s31, 0
      %p154 = por %p152, %p153
      %p155 = scmp.ne.s32.totalorder %s147, %s149
      %p156 = scmp.eq.s32.totalorder %s36, 3
      %p157 = por %p155, %p156
      %p158 = scmp.ne.s32.totalorder %s149, %s150
      %p159 = scmp.eq.s32.totalorder %s36, 0
      %p160 = por %p158, %p159
      %p161 = scmp.ne.s32.totalorder %s149, %s150
      %p162 = scmp.eq.s32.totalorder %s37, 3
      %p163 = por %p161, %p162
      %p165 = scmp.ne.s32.totalorder %s150, %s164
      %p166 = scmp.eq.s32.totalorder %s37, 0
      %p167 = por %p165, %p166
      %s169 = sadd.s32 %s168, 1
      %p172 = scmp.eq.s32.totalorder %s31, 3
      %p173 = scmp.ne.s32.totalorder %s168, %s170
      %p174 = scmp.eq.s32.totalorder %s31, 0
      %p175 = por %p173, %p174
      %p176 = scmp.ne.s32.totalorder %s168, %s170
      %p177 = scmp.eq.s32.totalorder %s36, 3
      %p178 = por %p176, %p177
      %p179 = scmp.ne.s32.totalorder %s170, %s171
      %p180 = scmp.eq.s32.totalorder %s36, 0
      %p181 = por %p179, %p180
      %p182 = scmp.ne.s32.totalorder %s170, %s171
      %p183 = scmp.eq.s32.totalorder %s37, 3
      %p184 = por %p182, %p183
      %p186 = scmp.ne.s32.totalorder %s171, %s185
      %p187 = scmp.eq.s32.totalorder %s37, 0
      %p188 = por %p186, %p187
      %s190 = sadd.s32 %s189, 1
      %p193 = scmp.eq.s32.totalorder %s31, 3
      %p194 = scmp.ne.s32.totalorder %s189, %s191
      %p195 = scmp.eq.s32.totalorder %s31, 0
      %p196 = por %p194, %p195
      %p197 = scmp.ne.s32.totalorder %s189, %s191
      %p198 = scmp.eq.s32.totalorder %s36, 3
      %p199 = por %p197, %p198
      %p200 = scmp.ne.s32.totalorder %s191, %s192
      %p201 = scmp.eq.s32.totalorder %s36, 0
      %p202 = por %p200, %p201
      %p203 = scmp.ne.s32.totalorder %s191, %s192
      %p204 = scmp.eq.s32.totalorder %s37, 3
      %p205 = por %p203, %p204
      %p207 = scmp.ne.s32.totalorder %s192, %s206
      %p208 = scmp.eq.s32.totalorder %s37, 0
      %p209 = por %p207, %p208
      %s211 = sadd.s32 %s210, 1
      %p214 = scmp.eq.s32.totalorder %s31, 3
      %p215 = scmp.ne.s32.totalorder %s210, %s212
      %p216 = scmp.eq.s32.totalorder %s31, 0
      %p217 = por %p215, %p216
      %p218 = scmp.ne.s32.totalorder %s210, %s212
      %p219 = scmp.eq.s32.totalorder %s36, 3
      %p220 = por %p218, %p219
      %p221 = scmp.ne.s32.totalorder %s212, %s213
      %p222 = scmp.eq.s32.totalorder %s36, 0
      %p223 = por %p221, %p222
      %p224 = scmp.ne.s32.totalorder %s212, %s213
      %p225 = scmp.eq.s32.totalorder %s37, 3
      %p226 = por %p224, %p225
      %p228 = scmp.ne.s32.totalorder %s213, %s227
      %p229 = scmp.eq.s32.totalorder %s37, 0
      %p230 = por %p228, %p229
      %s232 = sadd.s32 %s231, 1
      %p235 = scmp.eq.s32.totalorder %s31, 3
      %p236 = scmp.ne.s32.totalorder %s231, %s233
      %p237 = scmp.eq.s32.totalorder %s31, 0
      %p238 = por %p236, %p237
      %p239 = scmp.ne.s32.totalorder %s231, %s233
      %p240 = scmp.eq.s32.totalorder %s36, 3
      %p241 = por %p239, %p240
      %p242 = scmp.ne.s32.totalorder %s233, %s234
      %p243 = scmp.eq.s32.totalorder %s36, 0
      %p244 = por %p242, %p243
      %p245 = scmp.ne.s32.totalorder %s233, %s234
      %p246 = scmp.eq.s32.totalorder %s37, 3
      %p247 = por %p245, %p246
      %p249 = scmp.ne.s32.totalorder %s234, %s248
      %p250 = scmp.eq.s32.totalorder %s37, 0
      %p251 = por %p249, %p250
      %s252 = ssub.s32 %s38, %s50
      %s253 = ssub.s32 %s39, %s46
      %s254 = sor.u32 %s252, %s253
      %p255 = scmp.eq.s32.totalorder %s254, 0
      %s257 = sadd.s32 %s256, 1
      %s258 = scalar_select %p255, %s256, %s257
      %p261 = pneg %p255
      %p262 = scmp.eq.s32.totalorder %s31, 3
      %p263 = por %p261, %p262
      %p264 = scmp.ne.s32.totalorder %s256, %s259
      %p265 = scmp.eq.s32.totalorder %s31, 0
      %p266 = por %p264, %p265
      %p267 = scmp.ne.s32.totalorder %s256, %s259
      %p268 = scmp.eq.s32.totalorder %s36, 3
      %p269 = por %p267, %p268
      %p270 = scmp.ne.s32.totalorder %s259, %s260
      %p271 = scmp.eq.s32.totalorder %s36, 0
      %p272 = por %p270, %p271
      %p273 = scmp.ne.s32.totalorder %s259, %s260
      %p274 = scmp.eq.s32.totalorder %s37, 3
      %p275 = por %p273, %p274
      %p277 = scmp.ne.s32.totalorder %s260, %s276
      %p278 = scmp.eq.s32.totalorder %s37, 0
      %p279 = por %p277, %p278
      %s280 = ssub.s32 %s38, %s50
      %s281 = ssub.s32 %s39, %s46
      %s282 = sor.u32 %s280, %s281
      %p283 = scmp.eq.s32.totalorder %s282, 0
      %s285 = sadd.s32 %s284, 1
      %s286 = scalar_select %p283, %s284, %s285
      %p289 = pneg %p283
      %p290 = scmp.eq.s32.totalorder %s31, 3
      %p291 = por %p289, %p290
      %p292 = scmp.ne.s32.totalorder %s284, %s287
      %p293 = scmp.eq.s32.totalorder %s31, 0
      %p294 = por %p292, %p293
      %p295 = scmp.ne.s32.totalorder %s284, %s287
      %p296 = scmp.eq.s32.totalorder %s36, 3
      %p297 = por %p295, %p296
      %p298 = scmp.ne.s32.totalorder %s287, %s288
      %p299 = scmp.eq.s32.totalorder %s36, 0
      %p300 = por %p298, %p299
      %p301 = scmp.ne.s32.totalorder %s287, %s288
      %p302 = scmp.eq.s32.totalorder %s37, 3
      %p303 = por %p301, %p302
      %p305 = scmp.ne.s32.totalorder %s288, %s304
      %p306 = scmp.eq.s32.totalorder %s37, 0
      %p307 = por %p305, %p306
      %p308 = scmp.le.s32.totalorder 1, %s31
      %p309 = scmp.lt.s32.totalorder %s31, 5
      %p310 = pnand %p308, %p309
      %p311 = pneg %p310
      // Predicated region
      $region9: #{tpu_custom_call.1} parent=5 // pred_check
        _
      $region10: #{tpu_custom_call.1} parent=5 // pred_check_branch
        %313 = sbr.rel (%p310) target = $region12
      $region11: #{tpu_custom_call.1} parent=5 // pred_region
        %s314 = ssub.s32 %s31, 1
        // Predicated region
        $region13: #{tpu_custom_call.1} parent=11 // pred_check
          %p315 = pneg %p118
        $region14: #{tpu_custom_call.1} parent=11 // pred_check_branch
          %317 = sbr.rel (%p315) target = $region16
        $region15: #{tpu_custom_call.1} parent=11 // pred_region
          _
        $region16: #{tpu_custom_call.1} parent=11 // pred_fallthru
          _
        // Predicated region
        $region17: #{tpu_custom_call.1} parent=11 // pred_check
          %p318 = pneg %p139
        $region18: #{tpu_custom_call.1} parent=11 // pred_check_branch
          %320 = sbr.rel (%p318) target = $region20
        $region19: #{tpu_custom_call.1} parent=11 // pred_region
          _
        $region20: #{tpu_custom_call.1} parent=11 // pred_fallthru
          _
        // Predicated region
        $region21: #{tpu_custom_call.1} parent=11 // pred_check
          %p321 = pneg %p160
        $region22: #{tpu_custom_call.1} parent=11 // pred_check_branch
          %323 = sbr.rel (%p321) target = $region24
        $region23: #{tpu_custom_call.1} parent=11 // pred_region
          _
        $region24: #{tpu_custom_call.1} parent=11 // pred_fallthru
          _
        // Predicated region
        $region25: #{tpu_custom_call.1} parent=11 // pred_check
          %p324 = pneg %p181
        $region26: #{tpu_custom_call.1} parent=11 // pred_check_branch
          %326 = sbr.rel (%p324) target = $region28
        $region27: #{tpu_custom_call.1} parent=11 // pred_region
          _
        $region28: #{tpu_custom_call.1} parent=11 // pred_fallthru
          _
        // Predicated region
        $region29: #{tpu_custom_call.1} parent=11 // pred_check
          %p327 = pneg %p202
        $region30: #{tpu_custom_call.1} parent=11 // pred_check_branch
          %329 = sbr.rel (%p327) target = $region32
        $region31: #{tpu_custom_call.1} parent=11 // pred_region
          _
        $region32: #{tpu_custom_call.1} parent=11 // pred_fallthru
          _
        // Predicated region
        $region33: #{tpu_custom_call.1} parent=11 // pred_check
          %p330 = pneg %p223
        $region34: #{tpu_custom_call.1} parent=11 // pred_check_branch
          %332 = sbr.rel (%p330) target = $region36
        $region35: #{tpu_custom_call.1} parent=11 // pred_region
          _
        $region36: #{tpu_custom_call.1} parent=11 // pred_fallthru
          _
        // Predicated region
        $region37: #{tpu_custom_call.1} parent=11 // pred_check
          %p333 = pneg %p244
        $region38: #{tpu_custom_call.1} parent=11 // pred_check_branch
          %335 = sbr.rel (%p333) target = $region40
        $region39: #{tpu_custom_call.1} parent=11 // pred_region
          _
        $region40: #{tpu_custom_call.1} parent=11 // pred_fallthru
          _
      $region12: #{tpu_custom_call.1} parent=5 // pred_fallthru
        _
      %p336 = scmp.lt.s32.totalorder %s31, 4
      // Predicated region
      $region41: #{tpu_custom_call.1} parent=5 // pred_check
        %p337 = pneg %p336
      $region42: #{tpu_custom_call.1} parent=5 // pred_check_branch
        %339 = sbr.rel (%p337) target = $region44
      $region43: #{tpu_custom_call.1} parent=5 // pred_region
        // Predicated region
        $region45: #{tpu_custom_call.1} parent=43 // pred_check
          %p340 = pneg %p63
        $region46: #{tpu_custom_call.1} parent=43 // pred_check_branch
          %342 = sbr.rel (%p340) target = $region48
        $region47: #{tpu_custom_call.1} parent=43 // pred_region
          %s343 = sand.u32 %s53, 1
          %s344 = scalar_lea.sflag [#allocation6], %s343
          %s345 = sand.u32 %s53, 1
          %s346 = smul.addr %s345, 32
          %s347 = scalar_lea.vmem [#allocation5], %s346
          %s349 = ssub.s32 512, 512
          %350 = vsyncadd %s344, %s349
          %s351 = smul.addr %s38, 4
          %s352 = smul.addr %s351, 128
          %s353 = scalar_lea.hbm %s0, %s352
          %s354 = sshll.u32 %s347, 4
          %s355 = int_to_ptr.vmem [resolvable:$true] %s354
          %360 = dma.hbm_to_vmem [thread:$0]  %s353, 512, %s355, %s344, 256, 256, 16
        $region48: #{tpu_custom_call.1} parent=43 // pred_fallthru
          _
        // Predicated region
        $region49: #{tpu_custom_call.1} parent=43 // pred_check
          %p361 = pneg %p91
        $region50: #{tpu_custom_call.1} parent=43 // pred_check_branch
          %363 = sbr.rel (%p361) target = $region52
        $region51: #{tpu_custom_call.1} parent=43 // pred_region
          %s364 = sand.u32 %s81, 1
          %s365 = scalar_lea.sflag [#allocation9], %s364
          %s366 = sand.u32 %s81, 1
          %s367 = smul.addr %s366, 16
          %s368 = scalar_lea.vmem [#allocation8], %s367
          %s370 = ssub.s32 256, 256
          %371 = vsyncadd %s365, %s370
          %s372 = smul.addr %s38, 4
          %s373 = sadd.s32 %s39, %s372
          %s374 = smul.addr %s373, 128
          %s375 = scalar_lea.hbm %s1, %s374
          %s376 = sshll.u32 %s368, 4
          %s377 = int_to_ptr.vmem [resolvable:$true] %s376
          %382 = dma.hbm_to_vmem [thread:$0]  %s375, 256, %s377, %s365, 256, 128, 8
        $region52: #{tpu_custom_call.1} parent=43 // pred_fallthru
          _
      $region44: #{tpu_custom_call.1} parent=5 // pred_fallthru
        _
      %p383 = scmp.le.s32.totalorder 1, %s31
      %p384 = scmp.lt.s32.totalorder %s31, 5
      %p385 = pnand %p383, %p384
      %p386 = pneg %p385
      // Predicated region
      $region53: #{tpu_custom_call.1} parent=5 // pred_check
        _
      $region54: #{tpu_custom_call.1} parent=5 // pred_check_branch
        %388 = sbr.rel (%p385) target = $region56
      $region55: #{tpu_custom_call.1} parent=5 // pred_region
        %s389 = ssub.s32 %s31, 1
        %s390 = sand.u32 %s56, 1
        %s391 = scalar_lea.sflag [#allocation6], %s390
        %s392 = sand.u32 %s56, 1
        %s393 = smul.addr %s392, 32
        %s394 = scalar_lea.vmem [#allocation5], %s393
        // Predicated region
        $region57: #{tpu_custom_call.1} parent=55 // pred_check
          %p395 = pneg %p69
        $region58: #{tpu_custom_call.1} parent=55 // pred_check_branch
          %397 = sbr.rel (%p395) target = $region60
        $region59: #{tpu_custom_call.1} parent=55 // pred_region
          %398 = dma.done %s391, 512
        $region60: #{tpu_custom_call.1} parent=55 // pred_fallthru
          _
        %s399 = sand.u32 %s84, 1
        %s400 = scalar_lea.sflag [#allocation9], %s399
        %s401 = sand.u32 %s84, 1
        %s402 = smul.addr %s401, 16
        %s403 = scalar_lea.vmem [#allocation8], %s402
        // Predicated region
        $region61: #{tpu_custom_call.1} parent=55 // pred_check
          %p404 = pneg %p97
        $region62: #{tpu_custom_call.1} parent=55 // pred_check_branch
          %406 = sbr.rel (%p404) target = $region64
        $region63: #{tpu_custom_call.1} parent=55 // pred_region
          %407 = dma.done %s400, 256
        $region64: #{tpu_custom_call.1} parent=55 // pred_fallthru
          _
        %s408 = sand.u32 %s56, 1
        %s409 = scalar_lea.sflag [#allocation6], %s408
        %s410 = sand.u32 %s56, 1
        %s411 = smul.addr %s410, 32
        %s412 = scalar_lea.vmem [#allocation5], %s411
        %p413 = pneg %p69
        %p414 = pneg %p66
        %s415 = sand.u32 %s84, 1
        %s416 = scalar_lea.sflag [#allocation9], %s415
        %s417 = sand.u32 %s84, 1
        %s418 = smul.addr %s417, 16
        %s419 = scalar_lea.vmem [#allocation8], %s418
        %p420 = pneg %p97
        %p421 = pneg %p94
        %p422 = pneg %p118
        %p423 = pneg %p115
        %p424 = pneg %p139
        %p425 = pneg %p136
        %p426 = pneg %p160
        %p427 = pneg %p157
        %p428 = pneg %p181
        %p429 = pneg %p178
        %p430 = pneg %p202
        %p431 = pneg %p199
        %p432 = pneg %p223
        %p433 = pneg %p220
        %p434 = pneg %p244
        %p435 = pneg %p241
        %p436 = pneg %p272
        %p437 = pneg %p269
        %s438 = sand.u32 %s259, 1
        %s439 = scalar_lea.sflag [#allocation7], %s438
        %s440 = sand.u32 %s259, 1
        %s441 = smul.addr %s440, 16
        %s442 = scalar_lea.vmem [#allocation10], %s441
        %p443 = pneg %p300
        %p444 = pneg %p297
        %s445 = sand.u32 %s287, 1
        %s446 = scalar_lea.sflag [#allocation12], %s445
        %s447 = sand.u32 %s287, 1
        %s448 = smul.addr %s447, 256
        %s449 = scalar_lea.vmem [#allocation11], %s448
        %s450 = smul.u32 16, %s41
        %p451 = scmp.eq.s32.totalorder %s41, 0
        // Predicated region
        $region65: #{tpu_custom_call.1} parent=55 // pred_check
          %p452 = pneg %p451
        $region66: #{tpu_custom_call.1} parent=55 // pred_check_branch
          %454 = sbr.rel (%p452) target = $region68
        $region67: #{tpu_custom_call.1} parent=55 // pred_region
          %v455 = vld [vmem:[%s394] sm:$0xff]
          %v456 = vld [vmem:[%s394 + $0x8] sm:$0xff]
          %v457 = vld [vmem:[%s394 + $0x10] sm:$0xff]
          %v458 = vld [vmem:[%s394 + $0x18] sm:$0xff]
          %v459 = vld [vmem:[%s3] sm:$0x3]
          %v460 = vld [vmem:[%s6] sm:$0x3]
          %462 = vset.pattern.permute.xlu0 0
          %463 = vperm.xlu0 %462, %v460
          %v464 = vpop.permute.xlu0 %463
          %vm466 = vcmask 130048
          %v468 = vsel %vm466, %v459, 0
          %470 = vmatprep.subr.mxu0 %v456
          %471 = vmatpush1.msra.mxu0 %v455
          %472 = vmatprep.subr.mxu0 %v458
          %473 = vmatpush1.msra.mxu0 %v457
          %474 = vmatprep.subr.mxu0 0.0
          %475 = vmatpush1.msra.mxu0 0.0
          %476 = vmatprep.subr.mxu0 0.0
          %477 = vmatpush1.msra.mxu0 0.0
          %478 = vmatprep.subr.mxu0 0.0
          %479 = vmatpush1.msra.mxu0 0.0
          %480 = vmatprep.subr.mxu0 0.0
          %481 = vmatpush1.msra.mxu0 0.0
          %482 = vmatprep.subr.mxu0 0.0
          %483 = vmatpush1.msra.mxu0 0.0
          %484 = vmatprep.subr.mxu0 0.0
          %485 = vmatpush1.msra.mxu0 0.0
          %486 = vmatprep.subr.mxu0 0.0
          %487 = vmatpush1.msra.mxu0 0.0
          %488 = vmatprep.subr.mxu0 0.0
          %489 = vmatpush1.msra.mxu0 0.0
          %490 = vmatprep.subr.mxu0 0.0
          %491 = vmatpush1.msra.mxu0 0.0
          %492 = vmatprep.subr.mxu0 0.0
          %493 = vmatpush1.msra.mxu0 0.0
          %494 = vmatprep.subr.mxu0 0.0
          %495 = vmatpush1.msra.mxu0 0.0
          %496 = vmatprep.subr.mxu0 0.0
          %497 = vmatpush1.msra.mxu0 0.0
          %498 = vmatprep.subr.mxu0 0.0
          %499 = vmatpush1.msra.mxu0 0.0
          %500 = vmatprep.subr.mxu0 0.0
          %501 = vmatpush1.msra.mxu0 0.0
          %502 = vmatprep.subr.mxu0 0.0
          %503 = vmatpush1.msra.mxu0 0.0
          %504 = vmatprep.subr.mxu0 0.0
          %505 = vmatpush1.msra.mxu0 0.0
          %506 = vmatprep.subr.mxu0 0.0
          %507 = vmatpush1.msra.mxu0 0.0
          %508 = vmatprep.subr.mxu0 0.0
          %509 = vmatpush1.msra.mxu0 0.0
          %510 = vmatprep.subr.mxu0 0.0
          %511 = vmatpush1.msra.mxu0 0.0
          %512 = vmatprep.subr.mxu0 0.0
          %513 = vmatpush1.msra.mxu0 0.0
          %514 = vmatprep.subr.mxu0 0.0
          %515 = vmatpush1.msra.mxu0 0.0
          %516 = vmatprep.subr.mxu0 0.0
          %517 = vmatpush1.msra.mxu0 0.0
          %518 = vmatprep.subr.mxu0 0.0
          %519 = vmatpush1.msra.mxu0 0.0
          %520 = vmatprep.subr.mxu0 0.0
          %521 = vmatpush1.msra.mxu0 0.0
          %522 = vmatprep.subr.mxu0 0.0
          %523 = vmatpush1.msra.mxu0 0.0
          %524 = vmatprep.subr.mxu0 0.0
          %525 = vmatpush1.msra.mxu0 0.0
          %526 = vmatprep.subr.mxu0 0.0
          %527 = vmatpush1.msra.mxu0 0.0
          %528 = vmatprep.subr.mxu0 0.0
          %529 = vmatpush1.msra.mxu0 0.0
          %530 = vmatprep.subr.mxu0 0.0
          %531 = vmatpush1.msra.mxu0 0.0
          %532 = vmatprep.subr.mxu0 0.0
          %533 = vmatpush1.msra.mxu0 0.0
          %534 = vmatprep.mubr.f32.mxu0 0.0
          %535 = vmatmul.mubr.f32.gmra.mrb[0].mxu0 %v468
          %v536 = vpop.f32.mrb[0].mxu0
          %v537 = vadd.f32 %v464, %v536
          %v538 = vpop.f32.mrb[0].mxu0
          %v539 = vadd.f32 %v464, %v538
          %540 = vdwg.mxu0
          %v541 = vld [vmem:[%s4] sm:$0xff]
          %v542 = vld [vmem:[%s4 + $0x8] sm:$0xff]
          %v543 = vld [vmem:[%s7] sm:$0xff]
          %v544 = vld [vmem:[%s7 + $0x8] sm:$0xff]
          %546 = vset.pattern.permute.xlu0 0
          %547 = vperm.xlu0 %546, %v543
          %v548 = vpop.permute.xlu0 %547
          %551 = vset.pattern.permute.xlu0 0
          %552 = vperm.xlu0 %551, %v544
          %v553 = vpop.permute.xlu0 %552
          %v556 = vsel %vm466, %v541, 0
          %v559 = vsel %vm466, %v542, 0
          %561 = vmatprep.subr.mxu0 %v456
          %562 = vmatpush1.msra.mxu0 %v455
          %563 = vmatprep.subr.mxu0 %v458
          %564 = vmatpush1.msra.mxu0 %v457
          %565 = vmatprep.subr.mxu0 0.0
          %566 = vmatpush1.msra.mxu0 0.0
          %567 = vmatprep.subr.mxu0 0.0
          %568 = vmatpush1.msra.mxu0 0.0
          %569 = vmatprep.subr.mxu0 0.0
          %570 = vmatpush1.msra.mxu0 0.0
          %571 = vmatprep.subr.mxu0 0.0
          %572 = vmatpush1.msra.mxu0 0.0
          %573 = vmatprep.subr.mxu0 0.0
          %574 = vmatpush1.msra.mxu0 0.0
          %575 = vmatprep.subr.mxu0 0.0
          %576 = vmatpush1.msra.mxu0 0.0
          %577 = vmatprep.subr.mxu0 0.0
          %578 = vmatpush1.msra.mxu0 0.0
          %579 = vmatprep.subr.mxu0 0.0
          %580 = vmatpush1.msra.mxu0 0.0
          %581 = vmatprep.subr.mxu0 0.0
          %582 = vmatpush1.msra.mxu0 0.0
          %583 = vmatprep.subr.mxu0 0.0
          %584 = vmatpush1.msra.mxu0 0.0
          %585 = vmatprep.subr.mxu0 0.0
          %586 = vmatpush1.msra.mxu0 0.0
          %587 = vmatprep.subr.mxu0 0.0
          %588 = vmatpush1.msra.mxu0 0.0
          %589 = vmatprep.subr.mxu0 0.0
          %590 = vmatpush1.msra.mxu0 0.0
          %591 = vmatprep.subr.mxu0 0.0
          %592 = vmatpush1.msra.mxu0 0.0
          %593 = vmatprep.subr.mxu0 0.0
          %594 = vmatpush1.msra.mxu0 0.0
          %595 = vmatprep.subr.mxu0 0.0
          %596 = vmatpush1.msra.mxu0 0.0
          %597 = vmatprep.subr.mxu0 0.0
          %598 = vmatpush1.msra.mxu0 0.0
          %599 = vmatprep.subr.mxu0 0.0
          %600 = vmatpush1.msra.mxu0 0.0
          %601 = vmatprep.subr.mxu0 0.0
          %602 = vmatpush1.msra.mxu0 0.0
          %603 = vmatprep.subr.mxu0 0.0
          %604 = vmatpush1.msra.mxu0 0.0
          %605 = vmatprep.subr.mxu0 0.0
          %606 = vmatpush1.msra.mxu0 0.0
          %607 = vmatprep.subr.mxu0 0.0
          %608 = vmatpush1.msra.mxu0 0.0
          %609 = vmatprep.subr.mxu0 0.0
          %610 = vmatpush1.msra.mxu0 0.0
          %611 = vmatprep.subr.mxu0 0.0
          %612 = vmatpush1.msra.mxu0 0.0
          %613 = vmatprep.subr.mxu0 0.0
          %614 = vmatpush1.msra.mxu0 0.0
          %615 = vmatprep.subr.mxu0 0.0
          %616 = vmatpush1.msra.mxu0 0.0
          %617 = vmatprep.subr.mxu0 0.0
          %618 = vmatpush1.msra.mxu0 0.0
          %619 = vmatprep.subr.mxu0 0.0
          %620 = vmatpush1.msra.mxu0 0.0
          %621 = vmatprep.subr.mxu0 0.0
          %622 = vmatpush1.msra.mxu0 0.0
          %623 = vmatprep.subr.mxu0 0.0
          %624 = vmatpush1.msra.mxu0 0.0
          %625 = vmatprep.mubr.f32.mxu0 0.0
          %626 = vmatmul.mubr.f32.gmra.mrb[0].mxu0 %v556
          %v627 = vpop.f32.mrb[0].mxu0
          %v628 = vadd.f32 %v548, %v627
          %v629 = vpop.f32.mrb[0].mxu0
          %v630 = vadd.f32 %v548, %v629
          %631 = vmatprep.mubr.f32.mxu0 0.0
          %632 = vmatmul.mubr.f32.gmra.mrb[0].mxu0 %v559
          %v633 = vpop.f32.mrb[0].mxu0
          %v634 = vadd.f32 %v553, %v633
          %v635 = vpop.f32.mrb[0].mxu0
          %v636 = vadd.f32 %v553, %v635
          %637 = vdwg.mxu0
          %v640 = vcombine.low %v537, %v539
          %v642 = vunpack.c.l.s4 1983009808
          %v643 = vunpack.c.0.s8 %v642
          %v644 = vlaneseq
          %v645 = vshrl.u32 %v644, 7
          %v646 = vsub.s32 %v643, %v645
          %v647 = vrot.slane %v640, %v646
          %649 = vst [vmem:[#allocation2] sm:$0xf] %v647
          %650 = vst [vmem:[#allocation3] sm:$0xff] %v628
          %651 = vst [vmem:[#allocation3 + $0x8] sm:$0xff] %v630
          %652 = vst [vmem:[#allocation3 + $0x10] sm:$0xff] %v634
          %653 = vst [vmem:[#allocation3 + $0x18] sm:$0xff] %v636
        $region68: #{tpu_custom_call.1} parent=55 // pred_fallthru
          _
        %v654 = vld [vmem:[%s403] sm:$0xff]
        %v655 = vld [vmem:[%s403 + $0x8] sm:$0xff]
        %v656 = vld [vmem:[%s2] sm:$0x3]
        %v657 = vld [vmem:[%s5] sm:$0x3]
        %659 = vset.pattern.permute.xlu0 0
        %660 = vperm.xlu0 %659, %v657
        %v661 = vpop.permute.xlu0 %660
        %vm663 = vcmask 130048
        %v665 = vsel %vm663, %v656, 0
        %667 = vmatprep.subr.mxu0 0.0
        %668 = vmatpush1.msra.mxu0 %v654
        %669 = vmatprep.subr.mxu0 0.0
        %670 = vmatpush1.msra.mxu0 %v655
        %671 = vmatprep.subr.mxu0 0.0
        %672 = vmatpush1.msra.mxu0 0.0
        %673 = vmatprep.subr.mxu0 0.0
        %674 = vmatpush1.msra.mxu0 0.0
        %675 = vmatprep.subr.mxu0 0.0
        %676 = vmatpush1.msra.mxu0 0.0
        %677 = vmatprep.subr.mxu0 0.0
        %678 = vmatpush1.msra.mxu0 0.0
        %679 = vmatprep.subr.mxu0 0.0
        %680 = vmatpush1.msra.mxu0 0.0
        %681 = vmatprep.subr.mxu0 0.0
        %682 = vmatpush1.msra.mxu0 0.0
        %683 = vmatprep.subr.mxu0 0.0
        %684 = vmatpush1.msra.mxu0 0.0
        %685 = vmatprep.subr.mxu0 0.0
        %686 = vmatpush1.msra.mxu0 0.0
        %687 = vmatprep.subr.mxu0 0.0
        %688 = vmatpush1.msra.mxu0 0.0
        %689 = vmatprep.subr.mxu0 0.0
        %690 = vmatpush1.msra.mxu0 0.0
        %691 = vmatprep.subr.mxu0 0.0
        %692 = vmatpush1.msra.mxu0 0.0
        %693 = vmatprep.subr.mxu0 0.0
        %694 = vmatpush1.msra.mxu0 0.0
        %695 = vmatprep.subr.mxu0 0.0
        %696 = vmatpush1.msra.mxu0 0.0
        %697 = vmatprep.subr.mxu0 0.0
        %698 = vmatpush1.msra.mxu0 0.0
        %699 = vmatprep.subr.mxu0 0.0
        %700 = vmatpush1.msra.mxu0 0.0
        %701 = vmatprep.subr.mxu0 0.0
        %702 = vmatpush1.msra.mxu0 0.0
        %703 = vmatprep.subr.mxu0 0.0
        %704 = vmatpush1.msra.mxu0 0.0
        %705 = vmatprep.subr.mxu0 0.0
        %706 = vmatpush1.msra.mxu0 0.0
        %707 = vmatprep.subr.mxu0 0.0
        %708 = vmatpush1.msra.mxu0 0.0
        %709 = vmatprep.subr.mxu0 0.0
        %710 = vmatpush1.msra.mxu0 0.0
        %711 = vmatprep.subr.mxu0 0.0
        %712 = vmatpush1.msra.mxu0 0.0
        %713 = vmatprep.subr.mxu0 0.0
        %714 = vmatpush1.msra.mxu0 0.0
        %715 = vmatprep.subr.mxu0 0.0
        %716 = vmatpush1.msra.mxu0 0.0
        %717 = vmatprep.subr.mxu0 0.0
        %718 = vmatpush1.msra.mxu0 0.0
        %719 = vmatprep.subr.mxu0 0.0
        %720 = vmatpush1.msra.mxu0 0.0
        %721 = vmatprep.subr.mxu0 0.0
        %722 = vmatpush1.msra.mxu0 0.0
        %723 = vmatprep.subr.mxu0 0.0
        %724 = vmatpush1.msra.mxu0 0.0
        %725 = vmatprep.subr.mxu0 0.0
        %726 = vmatpush1.msra.mxu0 0.0
        %727 = vmatprep.subr.mxu0 0.0
        %728 = vmatpush1.msra.mxu0 0.0
        %729 = vmatprep.subr.mxu0 0.0
        %730 = vmatpush1.msra.mxu0 0.0
        %731 = vmatprep.mubr.f32.mxu0 0.0
        %732 = vmatmul.mubr.f32.gmra.mrb[0].mxu0 %v665
        %v733 = vpop.f32.mrb[0].mxu0
        %v734 = vadd.f32 %v661, %v733
        %v735 = vpop.f32.mrb[0].mxu0
        %736 = vdwg.mxu0
        %v737 = vld [vmem:[#allocation2] sm:$0xf]
        %738 = vxpose.xlu0.b32.start [1/16] %v734, 128
        %739 = vxpose.xlu0.b32.cont [2/16] 0.0, 128
        %740 = vxpose.xlu0.b32.cont [3/16] 0.0, 128
        %741 = vxpose.xlu0.b32.cont [4/16] 0.0, 128
        %742 = vxpose.xlu0.b32.cont [5/16] 0.0, 128
        %743 = vxpose.xlu0.b32.cont [6/16] 0.0, 128
        %744 = vxpose.xlu0.b32.cont [7/16] 0.0, 128
        %745 = vxpose.xlu0.b32.cont [8/16] 0.0, 128
        %746 = vxpose.xlu0.b32.cont [9/16] 0.0, 128
        %747 = vxpose.xlu0.b32.cont [10/16] 0.0, 128
        %748 = vxpose.xlu0.b32.cont [11/16] 0.0, 128
        %749 = vxpose.xlu0.b32.cont [12/16] 0.0, 128
        %750 = vxpose.xlu0.b32.cont [13/16] 0.0, 128
        %751 = vxpose.xlu0.b32.cont [14/16] 0.0, 128
        %752 = vxpose.xlu0.b32.cont [15/16] 0.0, 128
        %753 = vxpose.xlu0.b32.end [16/16] 0.0, 128
        %v754 = vpop.trf.xlu0
        %v755 = vpop.trf.xlu0
        %v756 = vpop.trf.xlu0
        %v757 = vpop.trf.xlu0
        %v758 = vpop.trf.xlu0
        %v759 = vpop.trf.xlu0
        %v760 = vpop.trf.xlu0
        %v761 = vpop.trf.xlu0
        %v762 = vpop.trf.xlu0
        %v763 = vpop.trf.xlu0
        %v764 = vpop.trf.xlu0
        %v765 = vpop.trf.xlu0
        %v766 = vpop.trf.xlu0
        %v767 = vpop.trf.xlu0
        %v768 = vpop.trf.xlu0
        %v769 = vpop.trf.xlu0
        %v772 = vunpack.c.l.s4 1983009808
        %v773 = vunpack.c.0.s8 %v772
        %v774 = vlaneseq
        %v775 = vshrl.u32 %v774, 7
        %v776 = vsub.s32 %v773, %v775
        %v777 = vrot.slane %v737, %v776
        %v778 = vcombine.high %v777, %v777
        %vm779 = vcmask 15360
        %v781 = vsel %vm779, %v754, 0
        %v784 = vsel %vm779, %v755, 0
        %v787 = vsel %vm779, %v756, 0
        %v790 = vsel %vm779, %v757, 0
        %v793 = vsel %vm779, %v758, 0
        %v796 = vsel %vm779, %v759, 0
        %v799 = vsel %vm779, %v760, 0
        %v802 = vsel %vm779, %v761, 0
        %v805 = vsel %vm779, %v762, 0
        %v808 = vsel %vm779, %v763, 0
        %v811 = vsel %vm779, %v764, 0
        %v814 = vsel %vm779, %v765, 0
        %v817 = vsel %vm779, %v766, 0
        %v820 = vsel %vm779, %v767, 0
        %v823 = vsel %vm779, %v768, 0
        %v826 = vsel %vm779, %v769, 0
        %vm828 = vcmask 1041408
        %v829 = vsel %vm828, %v777, 0
        %v831 = vsel %vm828, %v778, 0
        %833 = vmatprep.subr.mxu0 %v831
        %834 = vmatpush1.msra.mxu0 %v829
        %835 = vmatprep.subr.mxu0 0.0
        %836 = vmatpush1.msra.mxu0 0.0
        %837 = vmatprep.subr.mxu0 0.0
        %838 = vmatpush1.msra.mxu0 0.0
        %839 = vmatprep.subr.mxu0 0.0
        %840 = vmatpush1.msra.mxu0 0.0
        %841 = vmatprep.subr.mxu0 0.0
        %842 = vmatpush1.msra.mxu0 0.0
        %843 = vmatprep.subr.mxu0 0.0
        %844 = vmatpush1.msra.mxu0 0.0
        %845 = vmatprep.subr.mxu0 0.0
        %846 = vmatpush1.msra.mxu0 0.0
        %847 = vmatprep.subr.mxu0 0.0
        %848 = vmatpush1.msra.mxu0 0.0
        %849 = vmatprep.subr.mxu0 0.0
        %850 = vmatpush1.msra.mxu0 0.0
        %851 = vmatprep.subr.mxu0 0.0
        %852 = vmatpush1.msra.mxu0 0.0
        %853 = vmatprep.subr.mxu0 0.0
        %854 = vmatpush1.msra.mxu0 0.0
        %855 = vmatprep.subr.mxu0 0.0
        %856 = vmatpush1.msra.mxu0 0.0
        %857 = vmatprep.subr.mxu0 0.0
        %858 = vmatpush1.msra.mxu0 0.0
        %859 = vmatprep.subr.mxu0 0.0
        %860 = vmatpush1.msra.mxu0 0.0
        %861 = vmatprep.subr.mxu0 0.0
        %862 = vmatpush1.msra.mxu0 0.0
        %863 = vmatprep.subr.mxu0 0.0
        %864 = vmatpush1.msra.mxu0 0.0
        %865 = vmatprep.subr.mxu0 0.0
        %866 = vmatpush1.msra.mxu0 0.0
        %867 = vmatprep.subr.mxu0 0.0
        %868 = vmatpush1.msra.mxu0 0.0
        %869 = vmatprep.subr.mxu0 0.0
        %870 = vmatpush1.msra.mxu0 0.0
        %871 = vmatprep.subr.mxu0 0.0
        %872 = vmatpush1.msra.mxu0 0.0
        %873 = vmatprep.subr.mxu0 0.0
        %874 = vmatpush1.msra.mxu0 0.0
        %875 = vmatprep.subr.mxu0 0.0
        %876 = vmatpush1.msra.mxu0 0.0
        %877 = vmatprep.subr.mxu0 0.0
        %878 = vmatpush1.msra.mxu0 0.0
        %879 = vmatprep.subr.mxu0 0.0
        %880 = vmatpush1.msra.mxu0 0.0
        %881 = vmatprep.subr.mxu0 0.0
        %882 = vmatpush1.msra.mxu0 0.0
        %883 = vmatprep.subr.mxu0 0.0
        %884 = vmatpush1.msra.mxu0 0.0
        %885 = vmatprep.subr.mxu0 0.0
        %886 = vmatpush1.msra.mxu0 0.0
        %887 = vmatprep.subr.mxu0 0.0
        %888 = vmatpush1.msra.mxu0 0.0
        %889 = vmatprep.subr.mxu0 0.0
        %890 = vmatpush1.msra.mxu0 0.0
        %891 = vmatprep.subr.mxu0 0.0
        %892 = vmatpush1.msra.mxu0 0.0
        %893 = vmatprep.subr.mxu0 0.0
        %894 = vmatpush1.msra.mxu0 0.0
        %895 = vmatprep.subr.mxu0 0.0
        %896 = vmatpush1.msra.mxu0 0.0
        %897 = vmatprep.mubr.f32.mxu0 0.0
        %898 = vmatmul.mubr.f32.gmra.mrb[0].mxu0 %v781
        %v899 = vpop.f32.mrb[0].mxu0
        %v900 = vadd.f32 0.0, %v899
        %v901 = vpop.f32.mrb[0].mxu0
        %v902 = vadd.f32 0.0, %v901
        %903 = vmatprep.mubr.f32.mxu0 0.0
        %904 = vmatmul.mubr.f32.gmra.mrb[0].mxu0 %v784
        %v905 = vpop.f32.mrb[0].mxu0
        %v906 = vadd.f32 0.0, %v905
        %v907 = vpop.f32.mrb[0].mxu0
        %v908 = vadd.f32 0.0, %v907
        %909 = vmatprep.mubr.f32.mxu0 0.0
        %910 = vmatmul.mubr.f32.gmra.mrb[0].mxu0 %v787
        %v911 = vpop.f32.mrb[0].mxu0
        %v912 = vadd.f32 0.0, %v911
        %v913 = vpop.f32.mrb[0].mxu0
        %v914 = vadd.f32 0.0, %v913
        %915 = vmatprep.mubr.f32.mxu0 0.0
        %916 = vmatmul.mubr.f32.gmra.mrb[0].mxu0 %v790
        %v917 = vpop.f32.mrb[0].mxu0
        %v918 = vadd.f32 0.0, %v917
        %v919 = vpop.f32.mrb[0].mxu0
        %v920 = vadd.f32 0.0, %v919
        %921 = vmatprep.mubr.f32.mxu0 0.0
        %922 = vmatmul.mubr.f32.gmra.mrb[0].mxu0 %v793
        %v923 = vpop.f32.mrb[0].mxu0
        %v924 = vadd.f32 0.0, %v923
        %v925 = vpop.f32.mrb[0].mxu0
        %v926 = vadd.f32 0.0, %v925
        %927 = vmatprep.mubr.f32.mxu0 0.0
        %928 = vmatmul.mubr.f32.gmra.mrb[0].mxu0 %v796
        %v929 = vpop.f32.mrb[0].mxu0
        %v930 = vadd.f32 0.0, %v929
        %v931 = vpop.f32.mrb[0].mxu0
        %v932 = vadd.f32 0.0, %v931
        %933 = vmatprep.mubr.f32.mxu0 0.0
        %934 = vmatmul.mubr.f32.gmra.mrb[0].mxu0 %v799
        %v935 = vpop.f32.mrb[0].mxu0
        %v936 = vadd.f32 0.0, %v935
        %v937 = vpop.f32.mrb[0].mxu0
        %v938 = vadd.f32 0.0, %v937
        %939 = vmatprep.mubr.f32.mxu0 0.0
        %940 = vmatmul.mubr.f32.gmra.mrb[0].mxu0 %v802
        %v941 = vpop.f32.mrb[0].mxu0
        %v942 = vadd.f32 0.0, %v941
        %v943 = vpop.f32.mrb[0].mxu0
        %v944 = vadd.f32 0.0, %v943
        %945 = vmatprep.mubr.f32.mxu0 0.0
        %946 = vmatmul.mubr.f32.gmra.mrb[0].mxu0 %v805
        %v947 = vpop.f32.mrb[0].mxu0
        %v948 = vadd.f32 0.0, %v947
        %v949 = vpop.f32.mrb[0].mxu0
        %v950 = vadd.f32 0.0, %v949
        %951 = vmatprep.mubr.f32.mxu0 0.0
        %952 = vmatmul.mubr.f32.gmra.mrb[0].mxu0 %v808
        %v953 = vpop.f32.mrb[0].mxu0
        %v954 = vadd.f32 0.0, %v953
        %v955 = vpop.f32.mrb[0].mxu0
        %v956 = vadd.f32 0.0, %v955
        %957 = vmatprep.mubr.f32.mxu0 0.0
        %958 = vmatmul.mubr.f32.gmra.mrb[0].mxu0 %v811
        %v959 = vpop.f32.mrb[0].mxu0
        %v960 = vadd.f32 0.0, %v959
        %v961 = vpop.f32.mrb[0].mxu0
        %v962 = vadd.f32 0.0, %v961
        %963 = vmatprep.mubr.f32.mxu0 0.0
        %964 = vmatmul.mubr.f32.gmra.mrb[0].mxu0 %v814
        %v965 = vpop.f32.mrb[0].mxu0
        %v966 = vadd.f32 0.0, %v965
        %v967 = vpop.f32.mrb[0].mxu0
        %v968 = vadd.f32 0.0, %v967
        %969 = vmatprep.mubr.f32.mxu0 0.0
        %970 = vmatmul.mubr.f32.gmra.mrb[0].mxu0 %v817
        %v971 = vpop.f32.mrb[0].mxu0
        %v972 = vadd.f32 0.0, %v971
        %v973 = vpop.f32.mrb[0].mxu0
        %v974 = vadd.f32 0.0, %v973
        %975 = vmatprep.mubr.f32.mxu0 0.0
        %976 = vmatmul.mubr.f32.gmra.mrb[0].mxu0 %v820
        %v977 = vpop.f32.mrb[0].mxu0
        %v978 = vadd.f32 0.0, %v977
        %v979 = vpop.f32.mrb[0].mxu0
        %v980 = vadd.f32 0.0, %v979
        %981 = vmatprep.mubr.f32.mxu0 0.0
        %982 = vmatmul.mubr.f32.gmra.mrb[0].mxu0 %v823
        %v983 = vpop.f32.mrb[0].mxu0
        %v984 = vadd.f32 0.0, %v983
        %v985 = vpop.f32.mrb[0].mxu0
        %v986 = vadd.f32 0.0, %v985
        %987 = vmatprep.mubr.f32.mxu0 0.0
        %988 = vmatmul.mubr.f32.gmra.mrb[0].mxu0 %v826
        %v989 = vpop.f32.mrb[0].mxu0
        %v990 = vadd.f32 0.0, %v989
        %v991 = vpop.f32.mrb[0].mxu0
        %v992 = vadd.f32 0.0, %v991
        %993 = vdwg.mxu0
        %v994 = vmax.f32 %v900, %v902
        %995 = vmax.xlane.f32.xlu0 %v994
        %v996 = vpop.xlane.xlu0 %995
        %v997 = vmax.f32 %v906, %v908
        %998 = vmax.xlane.f32.xlu0 %v997
        %v999 = vpop.xlane.xlu0 %998
        %v1000 = vmax.f32 %v912, %v914
        %1001 = vmax.xlane.f32.xlu0 %v1000
        %v1002 = vpop.xlane.xlu0 %1001
        %v1003 = vmax.f32 %v918, %v920
        %1004 = vmax.xlane.f32.xlu0 %v1003
        %v1005 = vpop.xlane.xlu0 %1004
        %v1006 = vmax.f32 %v924, %v926
        %1007 = vmax.xlane.f32.xlu0 %v1006
        %v1008 = vpop.xlane.xlu0 %1007
        %v1009 = vmax.f32 %v930, %v932
        %1010 = vmax.xlane.f32.xlu0 %v1009
        %v1011 = vpop.xlane.xlu0 %1010
        %v1012 = vmax.f32 %v936, %v938
        %1013 = vmax.xlane.f32.xlu0 %v1012
        %v1014 = vpop.xlane.xlu0 %1013
        %v1015 = vmax.f32 %v942, %v944
        %1016 = vmax.xlane.f32.xlu0 %v1015
        %v1017 = vpop.xlane.xlu0 %1016
        %v1018 = vmax.f32 %v948, %v950
        %1019 = vmax.xlane.f32.xlu0 %v1018
        %v1020 = vpop.xlane.xlu0 %1019
        %v1021 = vmax.f32 %v954, %v956
        %1022 = vmax.xlane.f32.xlu0 %v1021
        %v1023 = vpop.xlane.xlu0 %1022
        %v1024 = vmax.f32 %v960, %v962
        %1025 = vmax.xlane.f32.xlu0 %v1024
        %v1026 = vpop.xlane.xlu0 %1025
        %v1027 = vmax.f32 %v966, %v968
        %1028 = vmax.xlane.f32.xlu0 %v1027
        %v1029 = vpop.xlane.xlu0 %1028
        %v1030 = vmax.f32 %v972, %v974
        %1031 = vmax.xlane.f32.xlu0 %v1030
        %v1032 = vpop.xlane.xlu0 %1031
        %v1033 = vmax.f32 %v978, %v980
        %1034 = vmax.xlane.f32.xlu0 %v1033
        %v1035 = vpop.xlane.xlu0 %1034
        %v1036 = vmax.f32 %v984, %v986
        %1037 = vmax.xlane.f32.xlu0 %v1036
        %v1038 = vpop.xlane.xlu0 %1037
        %v1039 = vmax.f32 %v990, %v992
        %1040 = vmax.xlane.f32.xlu0 %v1039
        %v1041 = vpop.xlane.xlu0 %1040
        %v1042 = vsub.f32 %v900, %v996
        %v1043 = vsub.f32 %v902, %v996
        %v1044 = vsub.f32 %v906, %v999
        %v1045 = vsub.f32 %v908, %v999
        %v1046 = vsub.f32 %v912, %v1002
        %v1047 = vsub.f32 %v914, %v1002
        %v1048 = vsub.f32 %v918, %v1005
        %v1049 = vsub.f32 %v920, %v1005
        %v1050 = vsub.f32 %v924, %v1008
        %v1051 = vsub.f32 %v926, %v1008
        %v1052 = vsub.f32 %v930, %v1011
        %v1053 = vsub.f32 %v932, %v1011
        %v1054 = vsub.f32 %v936, %v1014
        %v1055 = vsub.f32 %v938, %v1014
        %v1056 = vsub.f32 %v942, %v1017
        %v1057 = vsub.f32 %v944, %v1017
        %v1058 = vsub.f32 %v948, %v1020
        %v1059 = vsub.f32 %v950, %v1020
        %v1060 = vsub.f32 %v954, %v1023
        %v1061 = vsub.f32 %v956, %v1023
        %v1062 = vsub.f32 %v960, %v1026
        %v1063 = vsub.f32 %v962, %v1026
        %v1064 = vsub.f32 %v966, %v1029
        %v1065 = vsub.f32 %v968, %v1029
        %v1066 = vsub.f32 %v972, %v1032
        %v1067 = vsub.f32 %v974, %v1032
        %v1068 = vsub.f32 %v978, %v1035
        %v1069 = vsub.f32 %v980, %v1035
        %v1070 = vsub.f32 %v984, %v1038
        %v1071 = vsub.f32 %v986, %v1038
        %v1072 = vsub.f32 %v990, %v1041
        %v1073 = vsub.f32 %v992, %v1041
        %v1074 = vmul.f32 %v1042, 1.442695
        %v1075 = vpow.pop %v1074
        %v1076 = vmul.f32 %v1043, 1.442695
        %v1077 = vpow.pop %v1076
        %v1078 = vmul.f32 %v1044, 1.442695
        %v1079 = vpow.pop %v1078
        %v1080 = vmul.f32 %v1045, 1.442695
        %v1081 = vpow.pop %v1080
        %v1082 = vmul.f32 %v1046, 1.442695
        %v1083 = vpow.pop %v1082
        %v1084 = vmul.f32 %v1047, 1.442695
        %v1085 = vpow.pop %v1084
        %v1086 = vmul.f32 %v1048, 1.442695
        %v1087 = vpow.pop %v1086
        %v1088 = vmul.f32 %v1049, 1.442695
        %v1089 = vpow.pop %v1088
        %v1090 = vmul.f32 %v1050, 1.442695
        %v1091 = vpow.pop %v1090
        %v1092 = vmul.f32 %v1051, 1.442695
        %v1093 = vpow.pop %v1092
        %v1094 = vmul.f32 %v1052, 1.442695
        %v1095 = vpow.pop %v1094
        %v1096 = vmul.f32 %v1053, 1.442695
        %v1097 = vpow.pop %v1096
        %v1098 = vmul.f32 %v1054, 1.442695
        %v1099 = vpow.pop %v1098
        %v1100 = vmul.f32 %v1055, 1.442695
        %v1101 = vpow.pop %v1100
        %v1102 = vmul.f32 %v1056, 1.442695
        %v1103 = vpow.pop %v1102
        %v1104 = vmul.f32 %v1057, 1.442695
        %v1105 = vpow.pop %v1104
        %v1106 = vmul.f32 %v1058, 1.442695
        %v1107 = vpow.pop %v1106
        %v1108 = vmul.f32 %v1059, 1.442695
        %v1109 = vpow.pop %v1108
        %v1110 = vmul.f32 %v1060, 1.442695
        %v1111 = vpow.pop %v1110
        %v1112 = vmul.f32 %v1061, 1.442695
        %v1113 = vpow.pop %v1112
        %v1114 = vmul.f32 %v1062, 1.442695
        %v1115 = vpow.pop %v1114
        %v1116 = vmul.f32 %v1063, 1.442695
        %v1117 = vpow.pop %v1116
        %v1118 = vmul.f32 %v1064, 1.442695
        %v1119 = vpow.pop %v1118
        %v1120 = vmul.f32 %v1065, 1.442695
        %v1121 = vpow.pop %v1120
        %v1122 = vmul.f32 %v1066, 1.442695
        %v1123 = vpow.pop %v1122
        %v1124 = vmul.f32 %v1067, 1.442695
        %v1125 = vpow.pop %v1124
        %v1126 = vmul.f32 %v1068, 1.442695
        %v1127 = vpow.pop %v1126
        %v1128 = vmul.f32 %v1069, 1.442695
        %v1129 = vpow.pop %v1128
        %v1130 = vmul.f32 %v1070, 1.442695
        %v1131 = vpow.pop %v1130
        %v1132 = vmul.f32 %v1071, 1.442695
        %v1133 = vpow.pop %v1132
        %v1134 = vmul.f32 %v1072, 1.442695
        %v1135 = vpow.pop %v1134
        %v1136 = vmul.f32 %v1073, 1.442695
        %v1137 = vpow.pop %v1136
        %v1138 = vadd.f32 %v1075, %v1077
        %1139 = vadd.xlane.f32.xlu0 %v1138
        %v1140 = vpop.xlane.xlu0 %1139
        %v1141 = vadd.f32 %v1079, %v1081
        %1142 = vadd.xlane.f32.xlu0 %v1141
        %v1143 = vpop.xlane.xlu0 %1142
        %v1144 = vadd.f32 %v1083, %v1085
        %1145 = vadd.xlane.f32.xlu0 %v1144
        %v1146 = vpop.xlane.xlu0 %1145
        %v1147 = vadd.f32 %v1087, %v1089
        %1148 = vadd.xlane.f32.xlu0 %v1147
        %v1149 = vpop.xlane.xlu0 %1148
        %v1150 = vadd.f32 %v1091, %v1093
        %1151 = vadd.xlane.f32.xlu0 %v1150
        %v1152 = vpop.xlane.xlu0 %1151
        %v1153 = vadd.f32 %v1095, %v1097
        %1154 = vadd.xlane.f32.xlu0 %v1153
        %v1155 = vpop.xlane.xlu0 %1154
        %v1156 = vadd.f32 %v1099, %v1101
        %1157 = vadd.xlane.f32.xlu0 %v1156
        %v1158 = vpop.xlane.xlu0 %1157
        %v1159 = vadd.f32 %v1103, %v1105
        %1160 = vadd.xlane.f32.xlu0 %v1159
        %v1161 = vpop.xlane.xlu0 %1160
        %v1162 = vadd.f32 %v1107, %v1109
        %1163 = vadd.xlane.f32.xlu0 %v1162
        %v1164 = vpop.xlane.xlu0 %1163
        %v1165 = vadd.f32 %v1111, %v1113
        %1166 = vadd.xlane.f32.xlu0 %v1165
        %v1167 = vpop.xlane.xlu0 %1166
        %v1168 = vadd.f32 %v1115, %v1117
        %1169 = vadd.xlane.f32.xlu0 %v1168
        %v1170 = vpop.xlane.xlu0 %1169
        %v1171 = vadd.f32 %v1119, %v1121
        %1172 = vadd.xlane.f32.xlu0 %v1171
        %v1173 = vpop.xlane.xlu0 %1172
        %v1174 = vadd.f32 %v1123, %v1125
        %1175 = vadd.xlane.f32.xlu0 %v1174
        %v1176 = vpop.xlane.xlu0 %1175
        %v1177 = vadd.f32 %v1127, %v1129
        %1178 = vadd.xlane.f32.xlu0 %v1177
        %v1179 = vpop.xlane.xlu0 %1178
        %v1180 = vadd.f32 %v1131, %v1133
        %1181 = vadd.xlane.f32.xlu0 %v1180
        %v1182 = vpop.xlane.xlu0 %1181
        %v1183 = vadd.f32 %v1135, %v1137
        %1184 = vadd.xlane.f32.xlu0 %v1183
        %v1185 = vpop.xlane.xlu0 %1184
        %v1186 = vrcp.pop %v1140
        %v1187 = vrcp.pop %v1143
        %v1188 = vrcp.pop %v1146
        %v1189 = vrcp.pop %v1149
        %v1190 = vrcp.pop %v1152
        %v1191 = vrcp.pop %v1155
        %v1192 = vrcp.pop %v1158
        %v1193 = vrcp.pop %v1161
        %v1194 = vrcp.pop %v1164
        %v1195 = vrcp.pop %v1167
        %v1196 = vrcp.pop %v1170
        %v1197 = vrcp.pop %v1173
        %v1198 = vrcp.pop %v1176
        %v1199 = vrcp.pop %v1179
        %v1200 = vrcp.pop %v1182
        %v1201 = vrcp.pop %v1185
        %v1202 = vmul.f32 %v1075, %v1186
        %v1203 = vmul.f32 %v1077, %v1186
        %v1204 = vmul.f32 %v1079, %v1187
        %v1205 = vmul.f32 %v1081, %v1187
        %v1206 = vmul.f32 %v1083, %v1188
        %v1207 = vmul.f32 %v1085, %v1188
        %v1208 = vmul.f32 %v1087, %v1189
        %v1209 = vmul.f32 %v1089, %v1189
        %v1210 = vmul.f32 %v1091, %v1190
        %v1211 = vmul.f32 %v1093, %v1190
        %v1212 = vmul.f32 %v1095, %v1191
        %v1213 = vmul.f32 %v1097, %v1191
        %v1214 = vmul.f32 %v1099, %v1192
        %v1215 = vmul.f32 %v1101, %v1192
        %v1216 = vmul.f32 %v1103, %v1193
        %v1217 = vmul.f32 %v1105, %v1193
        %v1218 = vmul.f32 %v1107, %v1194
        %v1219 = vmul.f32 %v1109, %v1194
        %v1220 = vmul.f32 %v1111, %v1195
        %v1221 = vmul.f32 %v1113, %v1195
        %v1222 = vmul.f32 %v1115, %v1196
        %v1223 = vmul.f32 %v1117, %v1196
        %v1224 = vmul.f32 %v1119, %v1197
        %v1225 = vmul.f32 %v1121, %v1197
        %v1226 = vmul.f32 %v1123, %v1198
        %v1227 = vmul.f32 %v1125, %v1198
        %v1228 = vmul.f32 %v1127, %v1199
        %v1229 = vmul.f32 %v1129, %v1199
        %v1230 = vmul.f32 %v1131, %v1200
        %v1231 = vmul.f32 %v1133, %v1200
        %v1232 = vmul.f32 %v1135, %v1201
        %v1233 = vmul.f32 %v1137, %v1201
        %1234 = vst [vmem:[%s449] sm:$0xff] %v1202
        %1235 = vst [vmem:[%s449 + $0x8] sm:$0xff] %v1203
        %1236 = vst [vmem:[%s449 + $0x10] sm:$0xff] %v1204
        %1237 = vst [vmem:[%s449 + $0x18] sm:$0xff] %v1205
        %1238 = vst [vmem:[%s449 + $0x20] sm:$0xff] %v1206
        %1239 = vst [vmem:[%s449 + $0x28] sm:$0xff] %v1207
        %1240 = vst [vmem:[%s449 + $0x30] sm:$0xff] %v1208
        %1241 = vst [vmem:[%s449 + $0x38] sm:$0xff] %v1209
        %1242 = vst [vmem:[%s449 + $0x40] sm:$0xff] %v1210
        %1243 = vst [vmem:[%s449 + $0x48] sm:$0xff] %v1211
        %1244 = vst [vmem:[%s449 + $0x50] sm:$0xff] %v1212
        %1245 = vst [vmem:[%s449 + $0x58] sm:$0xff] %v1213
        %1246 = vst [vmem:[%s449 + $0x60] sm:$0xff] %v1214
        %1247 = vst [vmem:[%s449 + $0x68] sm:$0xff] %v1215
        %1248 = vst [vmem:[%s449 + $0x70] sm:$0xff] %v1216
        %1249 = vst [vmem:[%s449 + $0x78] sm:$0xff] %v1217
        %1250 = vst [vmem:[%s449 + $0x80] sm:$0xff] %v1218
        %1251 = vst [vmem:[%s449 + $0x88] sm:$0xff] %v1219
        %1252 = vst [vmem:[%s449 + $0x90] sm:$0xff] %v1220
        %1253 = vst [vmem:[%s449 + $0x98] sm:$0xff] %v1221
        %1254 = vst [vmem:[%s449 + $0xa0] sm:$0xff] %v1222
        %1255 = vst [vmem:[%s449 + $0xa8] sm:$0xff] %v1223
        %1256 = vst [vmem:[%s449 + $0xb0] sm:$0xff] %v1224
        %1257 = vst [vmem:[%s449 + $0xb8] sm:$0xff] %v1225
        %1258 = vst [vmem:[%s449 + $0xc0] sm:$0xff] %v1226
        %1259 = vst [vmem:[%s449 + $0xc8] sm:$0xff] %v1227
        %1260 = vst [vmem:[%s449 + $0xd0] sm:$0xff] %v1228
        %1261 = vst [vmem:[%s449 + $0xd8] sm:$0xff] %v1229
        %1262 = vst [vmem:[%s449 + $0xe0] sm:$0xff] %v1230
        %1263 = vst [vmem:[%s449 + $0xe8] sm:$0xff] %v1231
        %1264 = vst [vmem:[%s449 + $0xf0] sm:$0xff] %v1232
        %1265 = vst [vmem:[%s449 + $0xf8] sm:$0xff] %v1233
        %v1266 = vld [vmem:[#allocation3] sm:$0xff]
        %v1267 = vld [vmem:[#allocation3 + $0x8] sm:$0xff]
        %v1268 = vld [vmem:[#allocation3 + $0x10] sm:$0xff]
        %v1269 = vld [vmem:[#allocation3 + $0x18] sm:$0xff]
        %1270 = vmatprep.subr.mxu0 %v1203
        %1271 = vmatpush1.xpose.msra.mxu0 %v1202
        %1272 = vmatprep.subr.mxu0 %v1205
        %1273 = vmatpush1.xpose.msra.mxu0 %v1204
        %1274 = vmatprep.subr.mxu0 %v1207
        %1275 = vmatpush1.xpose.msra.mxu0 %v1206
        %1276 = vmatprep.subr.mxu0 %v1209
        %1277 = vmatpush1.xpose.msra.mxu0 %v1208
        %1278 = vmatprep.subr.mxu0 %v1211
        %1279 = vmatpush1.xpose.msra.mxu0 %v1210
        %1280 = vmatprep.subr.mxu0 %v1213
        %1281 = vmatpush1.xpose.msra.mxu0 %v1212
        %1282 = vmatprep.subr.mxu0 %v1215
        %1283 = vmatpush1.xpose.msra.mxu0 %v1214
        %1284 = vmatprep.subr.mxu0 %v1217
        %1285 = vmatpush1.xpose.msra.mxu0 %v1216
        %1286 = vmatprep.subr.mxu0 %v1219
        %1287 = vmatpush1.xpose.msra.mxu0 %v1218
        %1288 = vmatprep.subr.mxu0 %v1221
        %1289 = vmatpush1.xpose.msra.mxu0 %v1220
        %1290 = vmatprep.subr.mxu0 %v1223
        %1291 = vmatpush1.xpose.msra.mxu0 %v1222
        %1292 = vmatprep.subr.mxu0 %v1225
        %1293 = vmatpush1.xpose.msra.mxu0 %v1224
        %1294 = vmatprep.subr.mxu0 %v1227
        %1295 = vmatpush1.xpose.msra.mxu0 %v1226
        %1296 = vmatprep.subr.mxu0 %v1229
        %1297 = vmatpush1.xpose.msra.mxu0 %v1228
        %1298 = vmatprep.subr.mxu0 %v1231
        %1299 = vmatpush1.xpose.msra.mxu0 %v1230
        %1300 = vmatprep.subr.mxu0 %v1233
        %1301 = vmatpush1.xpose.msra.mxu0 %v1232
        %1302 = vmatprep.subr.mxu0 0.0
        %1303 = vmatpush1.xpose.msra.mxu0 0.0
        %1304 = vmatprep.subr.mxu0 0.0
        %1305 = vmatpush1.xpose.msra.mxu0 0.0
        %1306 = vmatprep.subr.mxu0 0.0
        %1307 = vmatpush1.xpose.msra.mxu0 0.0
        %1308 = vmatprep.subr.mxu0 0.0
        %1309 = vmatpush1.xpose.msra.mxu0 0.0
        %1310 = vmatprep.subr.mxu0 0.0
        %1311 = vmatpush1.xpose.msra.mxu0 0.0
        %1312 = vmatprep.subr.mxu0 0.0
        %1313 = vmatpush1.xpose.msra.mxu0 0.0
        %1314 = vmatprep.subr.mxu0 0.0
        %1315 = vmatpush1.xpose.msra.mxu0 0.0
        %1316 = vmatprep.subr.mxu0 0.0
        %1317 = vmatpush1.xpose.msra.mxu0 0.0
        %1318 = vmatprep.subr.mxu0 0.0
        %1319 = vmatpush1.xpose.msra.mxu0 0.0
        %1320 = vmatprep.subr.mxu0 0.0
        %1321 = vmatpush1.xpose.msra.mxu0 0.0
        %1322 = vmatprep.subr.mxu0 0.0
        %1323 = vmatpush1.xpose.msra.mxu0 0.0
        %1324 = vmatprep.subr.mxu0 0.0
        %1325 = vmatpush1.xpose.msra.mxu0 0.0
        %1326 = vmatprep.subr.mxu0 0.0
        %1327 = vmatpush1.xpose.msra.mxu0 0.0
        %1328 = vmatprep.subr.mxu0 0.0
        %1329 = vmatpush1.xpose.msra.mxu0 0.0
        %1330 = vmatprep.subr.mxu0 0.0
        %1331 = vmatpush1.xpose.msra.mxu0 0.0
        %1332 = vmatprep.subr.mxu0 0.0
        %1333 = vmatpush1.xpose.msra.mxu0 0.0
        %1334 = vmatprep.mubr.f32.mxu0 %v1267
        %1335 = vmatmul.mubr.f32.gmra.mrb[0].mxu0 %v1266
        %v1336 = vpop.f32.mrb[0].mxu0
        %v1337 = vadd.f32 0.0, %v1336
        %v1338 = vpop.f32.mrb[0].mxu0
        %1339 = vmatprep.mubr.f32.mxu0 %v1269
        %1340 = vmatmul.mubr.f32.gmra.mrb[0].mxu0 %v1268
        %v1341 = vpop.f32.mrb[0].mxu0
        %v1342 = vadd.f32 0.0, %v1341
        %v1343 = vpop.f32.mrb[0].mxu0
        %1344 = vdwg.mxu0
        %v1345 = vld [vmem:[#allocation4] sm:$0x1]
        %s1346 = vtos %v1345
        %v1347 = vstv %s1346
        %v1348 = vmul.f32 %v1347, %v1337
        %v1349 = vmul.f32 %v1347, %v1342
        %v1350 = vadd.f32 %v1348, %v654
        %v1351 = vadd.f32 %v1349, %v655
        %1352 = vst [vmem:[%s442] sm:$0xff] %v1350
        %1353 = vst [vmem:[%s442 + $0x8] sm:$0xff] %v1351
        %s1354 = sand.u32 %s259, 1
        %s1355 = scalar_lea.sflag [#allocation7], %s1354
        %s1356 = sand.u32 %s259, 1
        %s1357 = smul.addr %s1356, 16
        %s1358 = scalar_lea.vmem [#allocation10], %s1357
        %s1359 = sand.u32 %s287, 1
        %s1360 = scalar_lea.sflag [#allocation12], %s1359
        %s1361 = sand.u32 %s287, 1
        %s1362 = smul.addr %s1361, 256
        %s1363 = scalar_lea.vmem [#allocation11], %s1362
        // Predicated region
        $region69: #{tpu_custom_call.1} parent=55 // pred_check
          %p1364 = pneg %p269
        $region70: #{tpu_custom_call.1} parent=55 // pred_check_branch
          %1366 = sbr.rel (%p1364) target = $region72
        $region71: #{tpu_custom_call.1} parent=55 // pred_region
          %s1368 = ssub.s32 256, 256
          %1369 = vsyncadd %s1355, %s1368
          %s1370 = smul.addr %s40, 4
          %s1371 = sadd.s32 %s41, %s1370
          %s1372 = smul.addr %s1371, 128
          %s1373 = scalar_lea.hbm %s9, %s1372
          %s1374 = sshll.u32 %s1358, 4
          %s1375 = int_to_ptr.vmem [resolvable:$true] %s1374
          %1380 = dma.vmem_to_hbm [thread:$0]  %s1375, 256, %s1373, %s1355, 128, 256, 8
        $region72: #{tpu_custom_call.1} parent=55 // pred_fallthru
          _
        // Predicated region
        $region73: #{tpu_custom_call.1} parent=55 // pred_check
          %p1381 = pneg %p297
        $region74: #{tpu_custom_call.1} parent=55 // pred_check_branch
          %1383 = sbr.rel (%p1381) target = $region76
        $region75: #{tpu_custom_call.1} parent=55 // pred_region
          %s1384 = smul.u32 16, %s41
          %s1386 = ssub.s32 4096, 4096
          %1387 = vsyncadd %s1360, %s1386
          %s1388 = smul.addr %s1384, 2
          %s1389 = smul.addr %s40, 64
          %s1390 = sadd.s32 %s1388, %s1389
          %s1391 = smul.addr %s1390, 128
          %s1392 = scalar_lea.hbm %s10, %s1391
          %s1393 = sshll.u32 %s1363, 4
          %s1394 = int_to_ptr.vmem [resolvable:$true] %s1393
          %1399 = dma.vmem_to_hbm [thread:$0]  %s1394, 4096, %s1392, %s1360, 256, 256, 16
        $region76: #{tpu_custom_call.1} parent=55 // pred_fallthru
          _
      $region56: #{tpu_custom_call.1} parent=5 // pred_fallthru
        _
      %p1400 = scmp.le.s32.totalorder 2, %s31
      // Predicated region
      $region77: #{tpu_custom_call.1} parent=5 // pred_check
        %p1401 = pneg %p1400
      $region78: #{tpu_custom_call.1} parent=5 // pred_check_branch
        %1403 = sbr.rel (%p1401) target = $region80
      $region79: #{tpu_custom_call.1} parent=5 // pred_region
        %s1404 = ssub.s32 %s31, 2
        // Predicated region
        $region81: #{tpu_custom_call.1} parent=79 // pred_check
          %p1405 = pneg %p275
        $region82: #{tpu_custom_call.1} parent=79 // pred_check_branch
          %1407 = sbr.rel (%p1405) target = $region84
        $region83: #{tpu_custom_call.1} parent=79 // pred_region
          %s1408 = sand.u32 %s260, 1
          %s1409 = scalar_lea.sflag [#allocation7], %s1408
          %s1410 = sand.u32 %s260, 1
          %s1411 = smul.addr %s1410, 16
          %s1412 = scalar_lea.vmem [#allocation10], %s1411
          %1413 = dma.done %s1409, 256
        $region84: #{tpu_custom_call.1} parent=79 // pred_fallthru
          _
        // Predicated region
        $region85: #{tpu_custom_call.1} parent=79 // pred_check
          %p1414 = pneg %p303
        $region86: #{tpu_custom_call.1} parent=79 // pred_check_branch
          %1416 = sbr.rel (%p1414) target = $region88
        $region87: #{tpu_custom_call.1} parent=79 // pred_region
          %s1417 = sand.u32 %s288, 1
          %s1418 = scalar_lea.sflag [#allocation12], %s1417
          %s1419 = sand.u32 %s288, 1
          %s1420 = smul.addr %s1419, 256
          %s1421 = scalar_lea.vmem [#allocation11], %s1420
          %1422 = dma.done %s1418, 4096
        $region88: #{tpu_custom_call.1} parent=79 // pred_fallthru
          _
      $region80: #{tpu_custom_call.1} parent=5 // pred_fallthru
        _
    $region6: #{tpu_custom_call.1} parent=1 // loop_footer
      %s35 = sadd.s32 1, %s31
    $region7: #{tpu_custom_call.1} parent=1 // loop_footer_branch
      %30 = sbr.rel target = $region3
    $region8: #{tpu_custom_call.1} parent=1 // loop_exit
      _
    %1423 = vsyncpa [#allocation6], 1
    %s1424 = scalar_lea.sflag [#allocation6], 1
    %1425 = vsyncpa %s1424, 1
    %1426 = vsyncpa [#allocation9], 1
    %s1427 = scalar_lea.sflag [#allocation9], 1
    %1428 = vsyncpa %s1427, 1
    %1429 = vsyncpa [#allocation7], 1
    %s1430 = scalar_lea.sflag [#allocation7], 1
    %1431 = vsyncpa %s1430, 1
    %1432 = vsyncpa [#allocation12], 1
    %s1433 = scalar_lea.sflag [#allocation12], 1
    %1434 = vsyncpa %s1433, 1

</llo_original>
